<compile_context>
chip_gen: v7x
topology: tpu7x:2x2x1
jax: 0.10.0
libtpu: 0.0.40
codegen_flags: <defaults>
</compile_context>

<pallas_src>
import jax
import jax.numpy as jnp
from jax import lax
from jax.experimental import pallas as pl
from jax.experimental.pallas import tpu as pltpu

# ----- model sizes (from the PyTorch script) ----------------------------------
N_STIMULI = 10
N_RESPONSES = 5
N_OUTCOMES = 2
N_RO = N_RESPONSES * N_OUTCOMES          # 10 response-outcome conjunctions
N_DELAY = 5
FLAT = N_DELAY * N_STIMULI               # flattened delay-chain length (50)
DW = 128                                 # lane-padded width of packed rows

# ----- packed LHS lane layout (one (1,128) row drives the single fused matmul)
#   lanes 0:5    : response activation C (previous step)
#   lanes 16:66  : flattened delay chain, delay[d, s] at lane 16 + d*NS + s
#                  (row 0 == current stimulus, so stimulus weights key off
#                   weight rows 16:26)
DELAY_OFF = 16
# io-row-only lanes (never enter the matmul LHS):
NOISE_OFF = 96                           # pre-sampled response noise

# ----- packed weight layout: ONE (128,128) operand == one DMA == one MXU RHS --
#   rows 0:5     -> W_I                                     @ cols COL_CI
#   rows 16:26   -> W_S^T | W_C^T | W_S^T@W_F | U^T[0:10]
#   rows 26:66   -> U^T[10:50]
#   rows 126/127 -> reactive exc / inh constants (storage only; LHS lanes = 0)
ROW_REACT_EXC = 126
ROW_REACT_INH = 127
COL_RO = 0       # R-O predictions        W_S @ s      (width N_RO)
COL_TEMP = 16    # temporal prediction    sum(U*delay) (width N_RO)
COL_EXC = 32     # direct excitation      W_C @ s      (width N_RESPONSES)
COL_P = 40       # proactive term p       ro @ W_F     (width N_RESPONSES)
COL_CI = 48      # lateral term           C @ W_I      (width N_RESPONSES)

# ----- hyper-parameters (defaults of PROControl.__init__) ---------------------
DT = 0.1
BETA = 0.1
LAMBDA_DECAY = 0.95
PSI = 0.1
PHI = 0.1
RHO = 0.1
RESPONSE_THRESHOLD = 0.5
SIGMA = 0.1


def pro_control_kernel(io_ref, w_ref, state_ref,
                       mm_ref, act_ref, state_out_ref):
    f32 = jnp.float32
    n_steps = io_ref.shape[0]

    lane = lax.broadcasted_iota(jnp.int32, (1, DW), 1)
    ins_mask = (lane >= DELAY_OFF) & (lane < DELAY_OFF + N_STIMULI)   # stim insert
    keep_mask = (lane >= DELAY_OFF) & (lane < DELAY_OFF + FLAT)       # live delay lanes
    zero_tail = jnp.zeros((1, DW - N_RESPONSES), f32)

    # reactive excitation / inhibition: tiny parameter-only constants (hoisted)
    rexc = w_ref[ROW_REACT_EXC:ROW_REACT_EXC + 1, 0:N_RESPONSES]      # (1, NR)
    rinh = w_ref[ROW_REACT_INH:ROW_REACT_INH + 1, 0:N_RESPONSES]      # (1, NR)

    delay0 = state_ref[0:1, :]     # flattened delay chain at lanes 16:66
    elig0 = state_ref[1:2, :]      # flattened eligibility trace at lanes 16:66
    c0 = state_ref[2:3, :]         # response activation C at lanes 0:5

    def step(t, carry):
        delay, elig, c_wide = carry
        row = io_ref[pl.ds(t, 1), :]                                  # (1, DW)

        # delay-chain shift: lane roll by NS, insert stimulus into lanes 16:26,
        # zero everything outside the 50 live lanes (keeps carried state clean).
        rolled = pltpu.roll(delay, shift=N_STIMULI, axis=1)
        new_delay = jnp.where(ins_mask, row, jnp.where(keep_mask, rolled, 0.0))
        new_elig = new_delay + LAMBDA_DECAY * elig

        # ONE fused MXU push: lanes 0:5 carry C, lanes 16:66 carry the delay
        # chain (row 0 == current stimulus) -> ro, temporal, W_C@s, p, C@W_I
        # all come out of a single (1,128)x(128,128) matmul.
        lhs = new_delay + c_wide
        res = jnp.dot(lhs, w_ref[...], preferred_element_type=f32)    # (1, DW)

        dir_exc = res[:, COL_EXC:COL_EXC + N_RESPONSES]
        p = res[:, COL_P:COL_P + N_RESPONSES]                         # ro @ W_F (pre-folded)
        ci = res[:, COL_CI:COL_CI + N_RESPONSES]                      # C @ W_I
        noise = row[:, NOISE_OFF:NOISE_OFF + N_RESPONSES]
        c = c_wide[:, 0:N_RESPONSES]

        excitation = RHO * (dir_exc + jnp.maximum(-p, 0.0) + rexc)
        # TODO(synk): reference computes psi * matmul(stimuli, W_I), which is
        # shape-inconsistent ((n_stimuli,) @ (n_responses, n_responses)); we
        # apply the lateral-inhibition matrix W_I to the activation C instead.
        inhibition = PSI * ci + PHI * (jnp.maximum(p, 0.0) + rinh)

        delta_c = BETA * DT * (
            excitation * (1.0 - c) - (c + 0.05) * (inhibition + 1.0) + noise)
        c_new = jnp.clip(c + delta_c, 0.0, 1.0)
        c_new_wide = jnp.concatenate([c_new, zero_tail], axis=1)      # (1, DW)

        # lane-dense per-step stores (one full-width row each)
        idx = pl.ds(t, 1)
        mm_ref[idx, :] = res
        act_ref[idx, :] = c_new_wide
        return (new_delay, new_elig, c_new_wide)

    delay_f, elig_f, c_f = lax.fori_loop(
        0, n_steps, step, (delay0, elig0, c0), unroll=min(8, n_steps))

    state_out_ref[0:1, :] = delay_f
    state_out_ref[1:2, :] = elig_f
    state_out_ref[2:3, :] = c_f


def _full_spec(shape):
    nd = len(shape)
    return pl.BlockSpec(shape, lambda i, _nd=nd: (0,) * _nd)


def pack_params(params):
    """One-time packing of all weights into a single (128,128) MXU RHS operand."""
    f32 = jnp.float32
    w = jnp.zeros((DW, DW), f32)
    s0, s1 = DELAY_OFF, DELAY_OFF + N_STIMULI
    # temporal-prediction weights keyed off the full delay-chain lanes 16:66
    u_t = params["U"].reshape(N_RO, FLAT).T                            # (FLAT, NRO)
    w = w.at[DELAY_OFF:DELAY_OFF + FLAT, COL_TEMP:COL_TEMP + N_RO].set(u_t.astype(f32))
    # stimulus-path weights keyed off delay row 0 (== current stimulus), rows 16:26
    w = w.at[s0:s1, COL_RO:COL_RO + N_RO].set(params["W_S"].T.astype(f32))
    w = w.at[s0:s1, COL_EXC:COL_EXC + N_RESPONSES].set(params["W_C"].T.astype(f32))
    w_sf = params["W_S"].T.astype(f32) @ params["W_F"].astype(f32)     # fold W_F
    w = w.at[s0:s1, COL_P:COL_P + N_RESPONSES].set(w_sf)
    # lateral inhibition keyed off the C lanes 0:5
    w = w.at[0:N_RESPONSES, COL_CI:COL_CI + N_RESPONSES].set(params["W_I"].astype(f32))
    # reactive excitation / inhibition depend only on W_R -> hoisted out of the kernel
    w = w.at[ROW_REACT_EXC, 0:N_RESPONSES].set(
        jnp.sum(jnp.maximum(-params["W_R"], 0.0), axis=1).astype(f32))
    w = w.at[ROW_REACT_INH, 0:N_RESPONSES].set(
        jnp.sum(jnp.maximum(params["W_R"], 0.0), axis=1).astype(f32))
    return w


def pack_state(state):
    st = jnp.zeros((3, DW), jnp.float32)
    st = st.at[0, DELAY_OFF:DELAY_OFF + FLAT].set(state["delay_chain"].reshape(FLAT))
    st = st.at[1, DELAY_OFF:DELAY_OFF + FLAT].set(state["eligibility_trace"].reshape(FLAT))
    st = st.at[2, 0:N_RESPONSES].set(state["C"].reshape(N_RESPONSES))
    return st


def unpack_state(st):
    return {
        "delay_chain": st[0, DELAY_OFF:DELAY_OFF + FLAT].reshape(N_DELAY, N_STIMULI),
        "eligibility_trace": st[1, DELAY_OFF:DELAY_OFF + FLAT].reshape(N_DELAY, N_STIMULI),
        "C": st[2, 0:N_RESPONSES],
    }


@jax.jit
def pro_control_forward_seq(stimuli_seq, noise_seq, packed_weights, state):
    """Run T PROControl forward steps in ONE pallas_call.

    stimuli_seq: (T, n_stimuli); noise_seq: (T, n_responses) pre-sampled noise.
    Returns per-step (response, ro_pred, temporal_pred, response_discrete) with a
    leading time axis, plus the updated recurrent-state dict.  T == 1 reproduces
    a single PyTorch forward() call.
    """
    f32 = jnp.float32
    t_steps = stimuli_seq.shape[0]
    io = jnp.zeros((t_steps, DW), f32)
    # stimulus packed at the delay-chain row-0 lanes; noise packed at its own lanes
    io = io.at[:, DELAY_OFF:DELAY_OFF + N_STIMULI].set(stimuli_seq.astype(f32))
    io = io.at[:, NOISE_OFF:NOISE_OFF + N_RESPONSES].set(noise_seq.astype(f32))
    st = pack_state(state)

    out_shapes = (
        jax.ShapeDtypeStruct((t_steps, DW), f32),   # raw matmul rows: ro / temporal / aux
        jax.ShapeDtypeStruct((t_steps, DW), f32),   # response activation rows (C at 0:5)
        jax.ShapeDtypeStruct((3, DW), f32),         # final packed recurrent state
    )
    inputs = (io, packed_weights, st)
    mm, act, st_out = pl.pallas_call(
        pro_control_kernel,
        out_shape=out_shapes,
        grid=(1,),
        in_specs=[_full_spec(x.shape) for x in inputs],
        out_specs=tuple(_full_spec(o.shape) for o in out_shapes),
        input_output_aliases={2: 2},       # carried state is updated in place
        compiler_params=pltpu.CompilerParams(dimension_semantics=("arbitrary",)),
    )(*inputs)

    resp = act[:, 0:N_RESPONSES]
    ro = mm[:, COL_RO:COL_RO + N_RO]
    temporal = mm[:, COL_TEMP:COL_TEMP + N_RO]
    disc = (resp > RESPONSE_THRESHOLD).astype(f32)   # recomputed here: free, no kernel store
    return resp, ro, temporal, disc, unpack_state(st_out)


def _reference_forward_seq(stimuli_seq, noise_seq, params, state):
    """Plain-JAX step-by-step reference with identical semantics."""
    delay = state["delay_chain"]
    elig = state["eligibility_trace"]
    c = state["C"].reshape(N_RESPONSES)
    resps, ros, temps, discs = [], [], [], []
    for t in range(stimuli_seq.shape[0]):
        s = stimuli_seq[t]
        ro = params["W_S"] @ s
        delay = jnp.concatenate([s[None, :], delay[:-1]], axis=0)
        elig = delay + LAMBDA_DECAY * elig
        temporal = jnp.sum(params["U"] * delay[None], axis=(1, 2))
        exc = RHO * (params["W_C"] @ s
                     + jnp.maximum((-ro) @ params["W_F"], 0.0)
                     + jnp.sum(jnp.maximum(-params["W_R"], 0.0), axis=1))
        inh = PSI * (c @ params["W_I"]) + PHI * (
            jnp.maximum(ro @ params["W_F"], 0.0)
            + jnp.sum(jnp.maximum(params["W_R"], 0.0), axis=1))
        dc = BETA * DT * (exc * (1 - c) - (c + 0.05) * (inh + 1) + noise_seq[t])
        c = jnp.clip(c + dc, 0.0, 1.0)
        resps.append(c)
        ros.append(ro)
        temps.append(temporal)
        discs.append((c > RESPONSE_THRESHOLD).astype(jnp.float32))
    new_state = {"delay_chain": delay, "eligibility_trace": elig, "C": c}
    return (jnp.stack(resps), jnp.stack(ros), jnp.stack(temps),
            jnp.stack(discs), new_state)


if __name__ == "__main__":
    key = jax.random.PRNGKey(0)
    k1, k2, k3, k4, k5, k6, k7 = jax.random.split(key, 7)

    # Deterministic synthetic parameters (shapes from PROControl.__init__).
    W_S = jnp.abs(0.1 + 0.05 * jax.random.normal(k1, (N_RO, N_STIMULI), jnp.float32))
    W_C = jnp.ones((N_RESPONSES, N_STIMULI), jnp.float32)
    W_F = 0.1 * jax.random.normal(k2, (N_RO, N_RESPONSES), jnp.float32)
    norm_factor = jnp.sum(jnp.abs(W_F)) / (N_RESPONSES * N_OUTCOMES)
    W_F = jnp.where(norm_factor > 1.0, W_F / norm_factor, W_F)
    # W_R and U are zero in __init__; small nonzero values are used here so the
    # reactive / temporal terms are actually exercised.
    W_R = 0.05 * jax.random.normal(k3, (N_RESPONSES, N_RO), jnp.float32)
    W_I = -jnp.eye(N_RESPONSES, dtype=jnp.float32)
    U = 0.05 * jax.random.normal(k4, (N_RO, N_DELAY, N_STIMULI), jnp.float32)
    params = {"W_S": W_S, "W_C": W_C, "W_F": W_F, "W_R": W_R, "W_I": W_I, "U": U}

    # nonzero initial delay chain exercises the carried-state / roll path
    state = {
        "delay_chain": 0.1 * jax.random.normal(k7, (N_DELAY, N_STIMULI), jnp.float32),
        "eligibility_trace": jnp.zeros((N_DELAY, N_STIMULI), jnp.float32),
        "C": jnp.zeros((N_RESPONSES,), jnp.float32),
    }

    T = 8  # timesteps fused into one kernel launch
    stimuli_seq = jax.random.normal(k5, (T, N_STIMULI), jnp.float32)
    noise_seq = SIGMA * jax.random.normal(k6, (T, N_RESPONSES), jnp.float32)

    packed_w = pack_params(params)
    resp, ro_pred, temporal, disc, new_state = jax.block_until_ready(
        pro_control_forward_seq(stimuli_seq, noise_seq, packed_w, state))

    # Sanity check against a plain-JAX reference of the same semantics.
    r_ref, ro_ref, t_ref, d_ref, st_ref = _reference_forward_seq(
        stimuli_seq, noise_seq, params, state)

    assert jnp.allclose(resp, r_ref, rtol=1e-4, atol=1e-4)
    assert jnp.allclose(ro_pred, ro_ref, rtol=1e-4, atol=1e-4)
    assert jnp.allclose(temporal, t_ref, rtol=1e-4, atol=1e-4)
    assert jnp.allclose(disc, d_ref)
    assert jnp.allclose(new_state["delay_chain"], st_ref["delay_chain"],
                        rtol=1e-5, atol=1e-5)
    assert jnp.allclose(new_state["eligibility_trace"], st_ref["eligibility_trace"],
                        rtol=1e-5, atol=1e-5)
    assert jnp.allclose(new_state["C"], st_ref["C"], rtol=1e-4, atol=1e-4)

    print("KERNEL_OK")
</pallas_src>

<mosaic_0001>
module attributes {stable_mosaic.version = 11 : i64} {
  func.func @pro_control_kernel(%arg0: i32, %arg1: memref<8x128xf32, #tpu.memory_space<vmem>>, %arg2: memref<128x128xf32, #tpu.memory_space<vmem>>, %arg3: memref<3x128xf32, #tpu.memory_space<vmem>>, %arg4: memref<8x128xf32, #tpu.memory_space<vmem>>, %arg5: memref<8x128xf32, #tpu.memory_space<vmem>>, %arg6: memref<3x128xf32, #tpu.memory_space<vmem>>) attributes {dimension_semantics = [#tpu.dimension_semantics<arbitrary>], iteration_bounds = array<i64: 1>, scalar_prefetch = 0 : i64, scratch_operands = 0 : i64, tpu.core_type = #tpu.core_type<tc>, window_params = [{pipeline_mode = #tpu.pipeline_mode<synchronous>, transform_indices = @transform_0, window_bounds = array<i64: 8, 128>}, {pipeline_mode = #tpu.pipeline_mode<synchronous>, transform_indices = @transform_1, window_bounds = array<i64: 128, 128>}, {pipeline_mode = #tpu.pipeline_mode<synchronous>, transform_indices = @transform_2, window_bounds = array<i64: 3, 128>}, {pipeline_mode = #tpu.pipeline_mode<synchronous>, transform_indices = @transform_3, window_bounds = array<i64: 8, 128>}, {pipeline_mode = #tpu.pipeline_mode<synchronous>, transform_indices = @transform_4, window_bounds = array<i64: 8, 128>}, {pipeline_mode = #tpu.pipeline_mode<synchronous>, transform_indices = @transform_5, window_bounds = array<i64: 3, 128>}]} {
    %0 = tpu.iota {dimensions = array<i32: 1>} : vector<1x128xi32>
    %c16_i32 = arith.constant 16 : i32
    %1 = vector.broadcast %c16_i32 : i32 to vector<1x128xi32>
    %2 = arith.cmpi sge, %0, %1 : vector<1x128xi32>
    %c26_i32 = arith.constant 26 : i32
    %3 = vector.broadcast %c26_i32 : i32 to vector<1x128xi32>
    %4 = arith.cmpi slt, %0, %3 : vector<1x128xi32>
    %5 = arith.andi %2, %4 : vector<1x128xi1>
    %c16_i32_0 = arith.constant 16 : i32
    %6 = vector.broadcast %c16_i32_0 : i32 to vector<1x128xi32>
    %7 = arith.cmpi sge, %0, %6 : vector<1x128xi32>
    %c66_i32 = arith.constant 66 : i32
    %8 = vector.broadcast %c66_i32 : i32 to vector<1x128xi32>
    %9 = arith.cmpi slt, %0, %8 : vector<1x128xi32>
    %10 = arith.andi %7, %9 : vector<1x128xi1>
    %cst = arith.constant 0.000000e+00 : f32
    %11 = vector.broadcast %cst : f32 to vector<1x123xf32>
    %c126 = arith.constant 126 : index
    %c0 = arith.constant 0 : index
    %12 = vector.load %arg2[%c126, %c0] : memref<128x128xf32, #tpu.memory_space<vmem>>, vector<1x5xf32>
    %c127 = arith.constant 127 : index
    %c0_1 = arith.constant 0 : index
    %13 = vector.load %arg2[%c127, %c0_1] : memref<128x128xf32, #tpu.memory_space<vmem>>, vector<1x5xf32>
    %c0_2 = arith.constant 0 : index
    %c0_3 = arith.constant 0 : index
    %14 = vector.load %arg3[%c0_2, %c0_3] : memref<3x128xf32, #tpu.memory_space<vmem>>, vector<1x128xf32>
    %c1 = arith.constant 1 : index
    %c0_4 = arith.constant 0 : index
    %15 = vector.load %arg3[%c1, %c0_4] : memref<3x128xf32, #tpu.memory_space<vmem>>, vector<1x128xf32>
    %c2 = arith.constant 2 : index
    %c0_5 = arith.constant 0 : index
    %16 = vector.load %arg3[%c2, %c0_5] : memref<3x128xf32, #tpu.memory_space<vmem>>, vector<1x128xf32>
    %c0_i32 = arith.constant 0 : i32
    %17 = arith.index_cast %c0_i32 : i32 to index
    %c0_6 = arith.constant 0 : index
    %18 = vector.load %arg1[%17, %c0_6] : memref<8x128xf32, #tpu.memory_space<vmem>>, vector<1x128xf32>
    %c10_i32 = arith.constant 10 : i32
    %19 = tpu.dynamic_rotate %14 by %c10_i32 dim 1 : vector<1x128xf32>, i32 -> vector<1x128xf32>
    %cst_7 = arith.constant 0.000000e+00 : f32
    %20 = vector.broadcast %cst_7 : f32 to vector<1x128xf32>
    %21 = arith.select %10, %19, %20 : vector<1x128xi1>, vector<1x128xf32>
    %22 = arith.select %5, %18, %21 : vector<1x128xi1>, vector<1x128xf32>
    %cst_8 = arith.constant 0.949999988 : f32
    %23 = vector.broadcast %cst_8 : f32 to vector<1x128xf32>
    %24 = arith.mulf %23, %15 : vector<1x128xf32>
    %25 = arith.addf %22, %24 : vector<1x128xf32>
    %26 = arith.addf %22, %16 : vector<1x128xf32>
    %c0_9 = arith.constant 0 : index
    %c0_10 = arith.constant 0 : index
    %27 = vector.load %arg2[%c0_9, %c0_10] : memref<128x128xf32, #tpu.memory_space<vmem>>, vector<128x128xf32>
    %cst_11 = arith.constant dense<0.000000e+00> : vector<1x128xf32>
    %28 = tpu.matmul %26, %27, %cst_11 {dimension_numbers = #tpu.dot_dimension_numbers<[1], [0], [0], [1], [0, 0, 1, 1], [], []>} : vector<1x128xf32>, vector<128x128xf32>, vector<1x128xf32> -> vector<1x128xf32>
    %29 = vector.extract_strided_slice %28 {offsets = [0, 32], sizes = [1, 5], strides = [1, 1]} : vector<1x128xf32> to vector<1x5xf32>
    %30 = vector.extract_strided_slice %28 {offsets = [0, 40], sizes = [1, 5], strides = [1, 1]} : vector<1x128xf32> to vector<1x5xf32>
    %31 = vector.extract_strided_slice %28 {offsets = [0, 48], sizes = [1, 5], strides = [1, 1]} : vector<1x128xf32> to vector<1x5xf32>
    %32 = vector.extract_strided_slice %18 {offsets = [0, 96], sizes = [1, 5], strides = [1, 1]} : vector<1x128xf32> to vector<1x5xf32>
    %33 = vector.extract_strided_slice %16 {offsets = [0, 0], sizes = [1, 5], strides = [1, 1]} : vector<1x128xf32> to vector<1x5xf32>
    %cst_12 = arith.constant 0.000000e+00 : f32
    %34 = vector.broadcast %cst_12 : f32 to vector<1x5xf32>
    %35 = arith.subf %34, %30 : vector<1x5xf32>
    %cst_13 = arith.constant 0.000000e+00 : f32
    %36 = vector.broadcast %cst_13 : f32 to vector<1x5xf32>
    %37 = arith.maximumf %35, %36 : vector<1x5xf32>
    %38 = arith.addf %29, %37 : vector<1x5xf32>
    %39 = arith.addf %38, %12 : vector<1x5xf32>
    %cst_14 = arith.constant 1.000000e-01 : f32
    %40 = vector.broadcast %cst_14 : f32 to vector<1x5xf32>
    %41 = arith.mulf %40, %39 : vector<1x5xf32>
    %cst_15 = arith.constant 1.000000e-01 : f32
    %42 = vector.broadcast %cst_15 : f32 to vector<1x5xf32>
    %43 = arith.mulf %42, %31 : vector<1x5xf32>
    %cst_16 = arith.constant 0.000000e+00 : f32
    %44 = vector.broadcast %cst_16 : f32 to vector<1x5xf32>
    %45 = arith.maximumf %30, %44 : vector<1x5xf32>
    %46 = arith.addf %45, %13 : vector<1x5xf32>
    %cst_17 = arith.constant 1.000000e-01 : f32
    %47 = vector.broadcast %cst_17 : f32 to vector<1x5xf32>
    %48 = arith.mulf %47, %46 : vector<1x5xf32>
    %49 = arith.addf %43, %48 : vector<1x5xf32>
    %cst_18 = arith.constant 1.000000e+00 : f32
    %50 = vector.broadcast %cst_18 : f32 to vector<1x5xf32>
    %51 = arith.subf %50, %33 : vector<1x5xf32>
    %52 = arith.mulf %41, %51 : vector<1x5xf32>
    %cst_19 = arith.constant 5.000000e-02 : f32
    %53 = vector.broadcast %cst_19 : f32 to vector<1x5xf32>
    %54 = arith.addf %33, %53 : vector<1x5xf32>
    %cst_20 = arith.constant 1.000000e+00 : f32
    %55 = vector.broadcast %cst_20 : f32 to vector<1x5xf32>
    %56 = arith.addf %49, %55 : vector<1x5xf32>
    %57 = arith.mulf %54, %56 : vector<1x5xf32>
    %58 = arith.subf %52, %57 : vector<1x5xf32>
    %59 = arith.addf %58, %32 : vector<1x5xf32>
    %cst_21 = arith.constant 0.00999999977 : f32
    %60 = vector.broadcast %cst_21 : f32 to vector<1x5xf32>
    %61 = arith.mulf %60, %59 : vector<1x5xf32>
    %62 = arith.addf %33, %61 : vector<1x5xf32>
    %cst_22 = arith.constant 0.000000e+00 : f32
    %cst_23 = arith.constant 1.000000e+00 : f32
    %63 = vector.broadcast %cst_22 : f32 to vector<1x5xf32>
    %64 = arith.maximumf %63, %62 : vector<1x5xf32>
    %65 = vector.broadcast %cst_23 : f32 to vector<1x5xf32>
    %66 = arith.minimumf %65, %64 : vector<1x5xf32>
    %67 = tpu.concatenate %66, %11 in 1 : vector<1x5xf32>, vector<1x123xf32> -> vector<1x128xf32>
    %68 = arith.index_cast %c0_i32 : i32 to index
    %c0_24 = arith.constant 0 : index
    %69 = vector.load %arg4[%68, %c0_24] : memref<8x128xf32, #tpu.memory_space<vmem>>, vector<1x128xf32>
    tpu.vector_store %arg4[%68, %c0_24], %28 {strides = array<i32>} : memref<8x128xf32, #tpu.memory_space<vmem>>, vector<1x128xf32>,
    %70 = arith.index_cast %c0_i32 : i32 to index
    %c0_25 = arith.constant 0 : index
    %71 = vector.load %arg5[%70, %c0_25] : memref<8x128xf32, #tpu.memory_space<vmem>>, vector<1x128xf32>
    tpu.vector_store %arg5[%70, %c0_25], %67 {strides = array<i32>} : memref<8x128xf32, #tpu.memory_space<vmem>>, vector<1x128xf32>,
    %c1_i32 = arith.constant 1 : i32
    %72 = arith.index_cast %c1_i32 : i32 to index
    %c0_26 = arith.constant 0 : index
    %73 = vector.load %arg1[%72, %c0_26] : memref<8x128xf32, #tpu.memory_space<vmem>>, vector<1x128xf32>
    %c10_i32_27 = arith.constant 10 : i32
    %74 = tpu.dynamic_rotate %22 by %c10_i32_27 dim 1 : vector<1x128xf32>, i32 -> vector<1x128xf32>
    %cst_28 = arith.constant 0.000000e+00 : f32
    %75 = vector.broadcast %cst_28 : f32 to vector<1x128xf32>
    %76 = arith.select %10, %74, %75 : vector<1x128xi1>, vector<1x128xf32>
    %77 = arith.select %5, %73, %76 : vector<1x128xi1>, vector<1x128xf32>
    %cst_29 = arith.constant 0.949999988 : f32
    %78 = vector.broadcast %cst_29 : f32 to vector<1x128xf32>
    %79 = arith.mulf %78, %25 : vector<1x128xf32>
    %80 = arith.addf %77, %79 : vector<1x128xf32>
    %81 = arith.addf %77, %67 : vector<1x128xf32>
    %c0_30 = arith.constant 0 : index
    %c0_31 = arith.constant 0 : index
    %82 = vector.load %arg2[%c0_30, %c0_31] : memref<128x128xf32, #tpu.memory_space<vmem>>, vector<128x128xf32>
    %cst_32 = arith.constant dense<0.000000e+00> : vector<1x128xf32>
    %83 = tpu.matmul %81, %82, %cst_32 {dimension_numbers = #tpu.dot_dimension_numbers<[1], [0], [0], [1], [0, 0, 1, 1], [], []>} : vector<1x128xf32>, vector<128x128xf32>, vector<1x128xf32> -> vector<1x128xf32>
    %84 = vector.extract_strided_slice %83 {offsets = [0, 32], sizes = [1, 5], strides = [1, 1]} : vector<1x128xf32> to vector<1x5xf32>
    %85 = vector.extract_strided_slice %83 {offsets = [0, 40], sizes = [1, 5], strides = [1, 1]} : vector<1x128xf32> to vector<1x5xf32>
    %86 = vector.extract_strided_slice %83 {offsets = [0, 48], sizes = [1, 5], strides = [1, 1]} : vector<1x128xf32> to vector<1x5xf32>
    %87 = vector.extract_strided_slice %73 {offsets = [0, 96], sizes = [1, 5], strides = [1, 1]} : vector<1x128xf32> to vector<1x5xf32>
    %88 = vector.extract_strided_slice %67 {offsets = [0, 0], sizes = [1, 5], strides = [1, 1]} : vector<1x128xf32> to vector<1x5xf32>
    %cst_33 = arith.constant 0.000000e+00 : f32
    %89 = vector.broadcast %cst_33 : f32 to vector<1x5xf32>
    %90 = arith.subf %89, %85 : vector<1x5xf32>
    %cst_34 = arith.constant 0.000000e+00 : f32
    %91 = vector.broadcast %cst_34 : f32 to vector<1x5xf32>
    %92 = arith.maximumf %90, %91 : vector<1x5xf32>
    %93 = arith.addf %84, %92 : vector<1x5xf32>
    %94 = arith.addf %93, %12 : vector<1x5xf32>
    %cst_35 = arith.constant 1.000000e-01 : f32
    %95 = vector.broadcast %cst_35 : f32 to vector<1x5xf32>
    %96 = arith.mulf %95, %94 : vector<1x5xf32>
    %cst_36 = arith.constant 1.000000e-01 : f32
    %97 = vector.broadcast %cst_36 : f32 to vector<1x5xf32>
    %98 = arith.mulf %97, %86 : vector<1x5xf32>
    %cst_37 = arith.constant 0.000000e+00 : f32
    %99 = vector.broadcast %cst_37 : f32 to vector<1x5xf32>
    %100 = arith.maximumf %85, %99 : vector<1x5xf32>
    %101 = arith.addf %100, %13 : vector<1x5xf32>
    %cst_38 = arith.constant 1.000000e-01 : f32
    %102 = vector.broadcast %cst_38 : f32 to vector<1x5xf32>
    %103 = arith.mulf %102, %101 : vector<1x5xf32>
    %104 = arith.addf %98, %103 : vector<1x5xf32>
    %cst_39 = arith.constant 1.000000e+00 : f32
    %105 = vector.broadcast %cst_39 : f32 to vector<1x5xf32>
    %106 = arith.subf %105, %88 : vector<1x5xf32>
    %107 = arith.mulf %96, %106 : vector<1x5xf32>
    %cst_40 = arith.constant 5.000000e-02 : f32
    %108 = vector.broadcast %cst_40 : f32 to vector<1x5xf32>
    %109 = arith.addf %88, %108 : vector<1x5xf32>
    %cst_41 = arith.constant 1.000000e+00 : f32
    %110 = vector.broadcast %cst_41 : f32 to vector<1x5xf32>
    %111 = arith.addf %104, %110 : vector<1x5xf32>
    %112 = arith.mulf %109, %111 : vector<1x5xf32>
    %113 = arith.subf %107, %112 : vector<1x5xf32>
    %114 = arith.addf %113, %87 : vector<1x5xf32>
    %cst_42 = arith.constant 0.00999999977 : f32
    %115 = vector.broadcast %cst_42 : f32 to vector<1x5xf32>
    %116 = arith.mulf %115, %114 : vector<1x5xf32>
    %117 = arith.addf %88, %116 : vector<1x5xf32>
    %cst_43 = arith.constant 0.000000e+00 : f32
    %cst_44 = arith.constant 1.000000e+00 : f32
    %118 = vector.broadcast %cst_43 : f32 to vector<1x5xf32>
    %119 = arith.maximumf %118, %117 : vector<1x5xf32>
    %120 = vector.broadcast %cst_44 : f32 to vector<1x5xf32>
    %121 = arith.minimumf %120, %119 : vector<1x5xf32>
    %122 = tpu.concatenate %121, %11 in 1 : vector<1x5xf32>, vector<1x123xf32> -> vector<1x128xf32>
    %123 = arith.index_cast %c1_i32 : i32 to index
    %c0_45 = arith.constant 0 : index
    %124 = vector.load %arg4[%123, %c0_45] : memref<8x128xf32, #tpu.memory_space<vmem>>, vector<1x128xf32>
    tpu.vector_store %arg4[%123, %c0_45], %83 {strides = array<i32>} : memref<8x128xf32, #tpu.memory_space<vmem>>, vector<1x128xf32>,
    %125 = arith.index_cast %c1_i32 : i32 to index
    %c0_46 = arith.constant 0 : index
    %126 = vector.load %arg5[%125, %c0_46] : memref<8x128xf32, #tpu.memory_space<vmem>>, vector<1x128xf32>
    tpu.vector_store %arg5[%125, %c0_46], %122 {strides = array<i32>} : memref<8x128xf32, #tpu.memory_space<vmem>>, vector<1x128xf32>,
    %c2_i32 = arith.constant 2 : i32
    %127 = arith.index_cast %c2_i32 : i32 to index
    %c0_47 = arith.constant 0 : index
    %128 = vector.load %arg1[%127, %c0_47] : memref<8x128xf32, #tpu.memory_space<vmem>>, vector<1x128xf32>
    %c10_i32_48 = arith.constant 10 : i32
    %129 = tpu.dynamic_rotate %77 by %c10_i32_48 dim 1 : vector<1x128xf32>, i32 -> vector<1x128xf32>
    %cst_49 = arith.constant 0.000000e+00 : f32
    %130 = vector.broadcast %cst_49 : f32 to vector<1x128xf32>
    %131 = arith.select %10, %129, %130 : vector<1x128xi1>, vector<1x128xf32>
    %132 = arith.select %5, %128, %131 : vector<1x128xi1>, vector<1x128xf32>
    %cst_50 = arith.constant 0.949999988 : f32
    %133 = vector.broadcast %cst_50 : f32 to vector<1x128xf32>
    %134 = arith.mulf %133, %80 : vector<1x128xf32>
    %135 = arith.addf %132, %134 : vector<1x128xf32>
    %136 = arith.addf %132, %122 : vector<1x128xf32>
    %c0_51 = arith.constant 0 : index
    %c0_52 = arith.constant 0 : index
    %137 = vector.load %arg2[%c0_51, %c0_52] : memref<128x128xf32, #tpu.memory_space<vmem>>, vector<128x128xf32>
    %cst_53 = arith.constant dense<0.000000e+00> : vector<1x128xf32>
    %138 = tpu.matmul %136, %137, %cst_53 {dimension_numbers = #tpu.dot_dimension_numbers<[1], [0], [0], [1], [0, 0, 1, 1], [], []>} : vector<1x128xf32>, vector<128x128xf32>, vector<1x128xf32> -> vector<1x128xf32>
    %139 = vector.extract_strided_slice %138 {offsets = [0, 32], sizes = [1, 5], strides = [1, 1]} : vector<1x128xf32> to vector<1x5xf32>
    %140 = vector.extract_strided_slice %138 {offsets = [0, 40], sizes = [1, 5], strides = [1, 1]} : vector<1x128xf32> to vector<1x5xf32>
    %141 = vector.extract_strided_slice %138 {offsets = [0, 48], sizes = [1, 5], strides = [1, 1]} : vector<1x128xf32> to vector<1x5xf32>
    %142 = vector.extract_strided_slice %128 {offsets = [0, 96], sizes = [1, 5], strides = [1, 1]} : vector<1x128xf32> to vector<1x5xf32>
    %143 = vector.extract_strided_slice %122 {offsets = [0, 0], sizes = [1, 5], strides = [1, 1]} : vector<1x128xf32> to vector<1x5xf32>
    %cst_54 = arith.constant 0.000000e+00 : f32
    %144 = vector.broadcast %cst_54 : f32 to vector<1x5xf32>
    %145 = arith.subf %144, %140 : vector<1x5xf32>
    %cst_55 = arith.constant 0.000000e+00 : f32
    %146 = vector.broadcast %cst_55 : f32 to vector<1x5xf32>
    %147 = arith.maximumf %145, %146 : vector<1x5xf32>
    %148 = arith.addf %139, %147 : vector<1x5xf32>
    %149 = arith.addf %148, %12 : vector<1x5xf32>
    %cst_56 = arith.constant 1.000000e-01 : f32
    %150 = vector.broadcast %cst_56 : f32 to vector<1x5xf32>
    %151 = arith.mulf %150, %149 : vector<1x5xf32>
    %cst_57 = arith.constant 1.000000e-01 : f32
    %152 = vector.broadcast %cst_57 : f32 to vector<1x5xf32>
    %153 = arith.mulf %152, %141 : vector<1x5xf32>
    %cst_58 = arith.constant 0.000000e+00 : f32
    %154 = vector.broadcast %cst_58 : f32 to vector<1x5xf32>
    %155 = arith.maximumf %140, %154 : vector<1x5xf32>
    %156 = arith.addf %155, %13 : vector<1x5xf32>
    %cst_59 = arith.constant 1.000000e-01 : f32
    %157 = vector.broadcast %cst_59 : f32 to vector<1x5xf32>
    %158 = arith.mulf %157, %156 : vector<1x5xf32>
    %159 = arith.addf %153, %158 : vector<1x5xf32>
    %cst_60 = arith.constant 1.000000e+00 : f32
    %160 = vector.broadcast %cst_60 : f32 to vector<1x5xf32>
    %161 = arith.subf %160, %143 : vector<1x5xf32>
    %162 = arith.mulf %151, %161 : vector<1x5xf32>
    %cst_61 = arith.constant 5.000000e-02 : f32
    %163 = vector.broadcast %cst_61 : f32 to vector<1x5xf32>
    %164 = arith.addf %143, %163 : vector<1x5xf32>
    %cst_62 = arith.constant 1.000000e+00 : f32
    %165 = vector.broadcast %cst_62 : f32 to vector<1x5xf32>
    %166 = arith.addf %159, %165 : vector<1x5xf32>
    %167 = arith.mulf %164, %166 : vector<1x5xf32>
    %168 = arith.subf %162, %167 : vector<1x5xf32>
    %169 = arith.addf %168, %142 : vector<1x5xf32>
    %cst_63 = arith.constant 0.00999999977 : f32
    %170 = vector.broadcast %cst_63 : f32 to vector<1x5xf32>
    %171 = arith.mulf %170, %169 : vector<1x5xf32>
    %172 = arith.addf %143, %171 : vector<1x5xf32>
    %cst_64 = arith.constant 0.000000e+00 : f32
    %cst_65 = arith.constant 1.000000e+00 : f32
    %173 = vector.broadcast %cst_64 : f32 to vector<1x5xf32>
    %174 = arith.maximumf %173, %172 : vector<1x5xf32>
    %175 = vector.broadcast %cst_65 : f32 to vector<1x5xf32>
    %176 = arith.minimumf %175, %174 : vector<1x5xf32>
    %177 = tpu.concatenate %176, %11 in 1 : vector<1x5xf32>, vector<1x123xf32> -> vector<1x128xf32>
    %178 = arith.index_cast %c2_i32 : i32 to index
    %c0_66 = arith.constant 0 : index
    %179 = vector.load %arg4[%178, %c0_66] : memref<8x128xf32, #tpu.memory_space<vmem>>, vector<1x128xf32>
    tpu.vector_store %arg4[%178, %c0_66], %138 {strides = array<i32>} : memref<8x128xf32, #tpu.memory_space<vmem>>, vector<1x128xf32>,
    %180 = arith.index_cast %c2_i32 : i32 to index
    %c0_67 = arith.constant 0 : index
    %181 = vector.load %arg5[%180, %c0_67] : memref<8x128xf32, #tpu.memory_space<vmem>>, vector<1x128xf32>
    tpu.vector_store %arg5[%180, %c0_67], %177 {strides = array<i32>} : memref<8x128xf32, #tpu.memory_space<vmem>>, vector<1x128xf32>,
    %c3_i32 = arith.constant 3 : i32
    %182 = arith.index_cast %c3_i32 : i32 to index
    %c0_68 = arith.constant 0 : index
    %183 = vector.load %arg1[%182, %c0_68] : memref<8x128xf32, #tpu.memory_space<vmem>>, vector<1x128xf32>
    %c10_i32_69 = arith.constant 10 : i32
    %184 = tpu.dynamic_rotate %132 by %c10_i32_69 dim 1 : vector<1x128xf32>, i32 -> vector<1x128xf32>
    %cst_70 = arith.constant 0.000000e+00 : f32
    %185 = vector.broadcast %cst_70 : f32 to vector<1x128xf32>
    %186 = arith.select %10, %184, %185 : vector<1x128xi1>, vector<1x128xf32>
    %187 = arith.select %5, %183, %186 : vector<1x128xi1>, vector<1x128xf32>
    %cst_71 = arith.constant 0.949999988 : f32
    %188 = vector.broadcast %cst_71 : f32 to vector<1x128xf32>
    %189 = arith.mulf %188, %135 : vector<1x128xf32>
    %190 = arith.addf %187, %189 : vector<1x128xf32>
    %191 = arith.addf %187, %177 : vector<1x128xf32>
    %c0_72 = arith.constant 0 : index
    %c0_73 = arith.constant 0 : index
    %192 = vector.load %arg2[%c0_72, %c0_73] : memref<128x128xf32, #tpu.memory_space<vmem>>, vector<128x128xf32>
    %cst_74 = arith.constant dense<0.000000e+00> : vector<1x128xf32>
    %193 = tpu.matmul %191, %192, %cst_74 {dimension_numbers = #tpu.dot_dimension_numbers<[1], [0], [0], [1], [0, 0, 1, 1], [], []>} : vector<1x128xf32>, vector<128x128xf32>, vector<1x128xf32> -> vector<1x128xf32>
    %194 = vector.extract_strided_slice %193 {offsets = [0, 32], sizes = [1, 5], strides = [1, 1]} : vector<1x128xf32> to vector<1x5xf32>
    %195 = vector.extract_strided_slice %193 {offsets = [0, 40], sizes = [1, 5], strides = [1, 1]} : vector<1x128xf32> to vector<1x5xf32>
    %196 = vector.extract_strided_slice %193 {offsets = [0, 48], sizes = [1, 5], strides = [1, 1]} : vector<1x128xf32> to vector<1x5xf32>
    %197 = vector.extract_strided_slice %183 {offsets = [0, 96], sizes = [1, 5], strides = [1, 1]} : vector<1x128xf32> to vector<1x5xf32>
    %198 = vector.extract_strided_slice %177 {offsets = [0, 0], sizes = [1, 5], strides = [1, 1]} : vector<1x128xf32> to vector<1x5xf32>
    %cst_75 = arith.constant 0.000000e+00 : f32
    %199 = vector.broadcast %cst_75 : f32 to vector<1x5xf32>
    %200 = arith.subf %199, %195 : vector<1x5xf32>
    %cst_76 = arith.constant 0.000000e+00 : f32
    %201 = vector.broadcast %cst_76 : f32 to vector<1x5xf32>
    %202 = arith.maximumf %200, %201 : vector<1x5xf32>
    %203 = arith.addf %194, %202 : vector<1x5xf32>
    %204 = arith.addf %203, %12 : vector<1x5xf32>
    %cst_77 = arith.constant 1.000000e-01 : f32
    %205 = vector.broadcast %cst_77 : f32 to vector<1x5xf32>
    %206 = arith.mulf %205, %204 : vector<1x5xf32>
    %cst_78 = arith.constant 1.000000e-01 : f32
    %207 = vector.broadcast %cst_78 : f32 to vector<1x5xf32>
    %208 = arith.mulf %207, %196 : vector<1x5xf32>
    %cst_79 = arith.constant 0.000000e+00 : f32
    %209 = vector.broadcast %cst_79 : f32 to vector<1x5xf32>
    %210 = arith.maximumf %195, %209 : vector<1x5xf32>
    %211 = arith.addf %210, %13 : vector<1x5xf32>
    %cst_80 = arith.constant 1.000000e-01 : f32
    %212 = vector.broadcast %cst_80 : f32 to vector<1x5xf32>
    %213 = arith.mulf %212, %211 : vector<1x5xf32>
    %214 = arith.addf %208, %213 : vector<1x5xf32>
    %cst_81 = arith.constant 1.000000e+00 : f32
    %215 = vector.broadcast %cst_81 : f32 to vector<1x5xf32>
    %216 = arith.subf %215, %198 : vector<1x5xf32>
    %217 = arith.mulf %206, %216 : vector<1x5xf32>
    %cst_82 = arith.constant 5.000000e-02 : f32
    %218 = vector.broadcast %cst_82 : f32 to vector<1x5xf32>
    %219 = arith.addf %198, %218 : vector<1x5xf32>
    %cst_83 = arith.constant 1.000000e+00 : f32
    %220 = vector.broadcast %cst_83 : f32 to vector<1x5xf32>
    %221 = arith.addf %214, %220 : vector<1x5xf32>
    %222 = arith.mulf %219, %221 : vector<1x5xf32>
    %223 = arith.subf %217, %222 : vector<1x5xf32>
    %224 = arith.addf %223, %197 : vector<1x5xf32>
    %cst_84 = arith.constant 0.00999999977 : f32
    %225 = vector.broadcast %cst_84 : f32 to vector<1x5xf32>
    %226 = arith.mulf %225, %224 : vector<1x5xf32>
    %227 = arith.addf %198, %226 : vector<1x5xf32>
    %cst_85 = arith.constant 0.000000e+00 : f32
    %cst_86 = arith.constant 1.000000e+00 : f32
    %228 = vector.broadcast %cst_85 : f32 to vector<1x5xf32>
    %229 = arith.maximumf %228, %227 : vector<1x5xf32>
    %230 = vector.broadcast %cst_86 : f32 to vector<1x5xf32>
    %231 = arith.minimumf %230, %229 : vector<1x5xf32>
    %232 = tpu.concatenate %231, %11 in 1 : vector<1x5xf32>, vector<1x123xf32> -> vector<1x128xf32>
    %233 = arith.index_cast %c3_i32 : i32 to index
    %c0_87 = arith.constant 0 : index
    %234 = vector.load %arg4[%233, %c0_87] : memref<8x128xf32, #tpu.memory_space<vmem>>, vector<1x128xf32>
    tpu.vector_store %arg4[%233, %c0_87], %193 {strides = array<i32>} : memref<8x128xf32, #tpu.memory_space<vmem>>, vector<1x128xf32>,
    %235 = arith.index_cast %c3_i32 : i32 to index
    %c0_88 = arith.constant 0 : index
    %236 = vector.load %arg5[%235, %c0_88] : memref<8x128xf32, #tpu.memory_space<vmem>>, vector<1x128xf32>
    tpu.vector_store %arg5[%235, %c0_88], %232 {strides = array<i32>} : memref<8x128xf32, #tpu.memory_space<vmem>>, vector<1x128xf32>,
    %c4_i32 = arith.constant 4 : i32
    %237 = arith.index_cast %c4_i32 : i32 to index
    %c0_89 = arith.constant 0 : index
    %238 = vector.load %arg1[%237, %c0_89] : memref<8x128xf32, #tpu.memory_space<vmem>>, vector<1x128xf32>
    %c10_i32_90 = arith.constant 10 : i32
    %239 = tpu.dynamic_rotate %187 by %c10_i32_90 dim 1 : vector<1x128xf32>, i32 -> vector<1x128xf32>
    %cst_91 = arith.constant 0.000000e+00 : f32
    %240 = vector.broadcast %cst_91 : f32 to vector<1x128xf32>
    %241 = arith.select %10, %239, %240 : vector<1x128xi1>, vector<1x128xf32>
    %242 = arith.select %5, %238, %241 : vector<1x128xi1>, vector<1x128xf32>
    %cst_92 = arith.constant 0.949999988 : f32
    %243 = vector.broadcast %cst_92 : f32 to vector<1x128xf32>
    %244 = arith.mulf %243, %190 : vector<1x128xf32>
    %245 = arith.addf %242, %244 : vector<1x128xf32>
    %246 = arith.addf %242, %232 : vector<1x128xf32>
    %c0_93 = arith.constant 0 : index
    %c0_94 = arith.constant 0 : index
    %247 = vector.load %arg2[%c0_93, %c0_94] : memref<128x128xf32, #tpu.memory_space<vmem>>, vector<128x128xf32>
    %cst_95 = arith.constant dense<0.000000e+00> : vector<1x128xf32>
    %248 = tpu.matmul %246, %247, %cst_95 {dimension_numbers = #tpu.dot_dimension_numbers<[1], [0], [0], [1], [0, 0, 1, 1], [], []>} : vector<1x128xf32>, vector<128x128xf32>, vector<1x128xf32> -> vector<1x128xf32>
    %249 = vector.extract_strided_slice %248 {offsets = [0, 32], sizes = [1, 5], strides = [1, 1]} : vector<1x128xf32> to vector<1x5xf32>
    %250 = vector.extract_strided_slice %248 {offsets = [0, 40], sizes = [1, 5], strides = [1, 1]} : vector<1x128xf32> to vector<1x5xf32>
    %251 = vector.extract_strided_slice %248 {offsets = [0, 48], sizes = [1, 5], strides = [1, 1]} : vector<1x128xf32> to vector<1x5xf32>
    %252 = vector.extract_strided_slice %238 {offsets = [0, 96], sizes = [1, 5], strides = [1, 1]} : vector<1x128xf32> to vector<1x5xf32>
    %253 = vector.extract_strided_slice %232 {offsets = [0, 0], sizes = [1, 5], strides = [1, 1]} : vector<1x128xf32> to vector<1x5xf32>
    %cst_96 = arith.constant 0.000000e+00 : f32
    %254 = vector.broadcast %cst_96 : f32 to vector<1x5xf32>
    %255 = arith.subf %254, %250 : vector<1x5xf32>
    %cst_97 = arith.constant 0.000000e+00 : f32
    %256 = vector.broadcast %cst_97 : f32 to vector<1x5xf32>
    %257 = arith.maximumf %255, %256 : vector<1x5xf32>
    %258 = arith.addf %249, %257 : vector<1x5xf32>
    %259 = arith.addf %258, %12 : vector<1x5xf32>
    %cst_98 = arith.constant 1.000000e-01 : f32
    %260 = vector.broadcast %cst_98 : f32 to vector<1x5xf32>
    %261 = arith.mulf %260, %259 : vector<1x5xf32>
    %cst_99 = arith.constant 1.000000e-01 : f32
    %262 = vector.broadcast %cst_99 : f32 to vector<1x5xf32>
    %263 = arith.mulf %262, %251 : vector<1x5xf32>
    %cst_100 = arith.constant 0.000000e+00 : f32
    %264 = vector.broadcast %cst_100 : f32 to vector<1x5xf32>
    %265 = arith.maximumf %250, %264 : vector<1x5xf32>
    %266 = arith.addf %265, %13 : vector<1x5xf32>
    %cst_101 = arith.constant 1.000000e-01 : f32
    %267 = vector.broadcast %cst_101 : f32 to vector<1x5xf32>
    %268 = arith.mulf %267, %266 : vector<1x5xf32>
    %269 = arith.addf %263, %268 : vector<1x5xf32>
    %cst_102 = arith.constant 1.000000e+00 : f32
    %270 = vector.broadcast %cst_102 : f32 to vector<1x5xf32>
    %271 = arith.subf %270, %253 : vector<1x5xf32>
    %272 = arith.mulf %261, %271 : vector<1x5xf32>
    %cst_103 = arith.constant 5.000000e-02 : f32
    %273 = vector.broadcast %cst_103 : f32 to vector<1x5xf32>
    %274 = arith.addf %253, %273 : vector<1x5xf32>
    %cst_104 = arith.constant 1.000000e+00 : f32
    %275 = vector.broadcast %cst_104 : f32 to vector<1x5xf32>
    %276 = arith.addf %269, %275 : vector<1x5xf32>
    %277 = arith.mulf %274, %276 : vector<1x5xf32>
    %278 = arith.subf %272, %277 : vector<1x5xf32>
    %279 = arith.addf %278, %252 : vector<1x5xf32>
    %cst_105 = arith.constant 0.00999999977 : f32
    %280 = vector.broadcast %cst_105 : f32 to vector<1x5xf32>
    %281 = arith.mulf %280, %279 : vector<1x5xf32>
    %282 = arith.addf %253, %281 : vector<1x5xf32>
    %cst_106 = arith.constant 0.000000e+00 : f32
    %cst_107 = arith.constant 1.000000e+00 : f32
    %283 = vector.broadcast %cst_106 : f32 to vector<1x5xf32>
    %284 = arith.maximumf %283, %282 : vector<1x5xf32>
    %285 = vector.broadcast %cst_107 : f32 to vector<1x5xf32>
    %286 = arith.minimumf %285, %284 : vector<1x5xf32>
    %287 = tpu.concatenate %286, %11 in 1 : vector<1x5xf32>, vector<1x123xf32> -> vector<1x128xf32>
    %288 = arith.index_cast %c4_i32 : i32 to index
    %c0_108 = arith.constant 0 : index
    %289 = vector.load %arg4[%288, %c0_108] : memref<8x128xf32, #tpu.memory_space<vmem>>, vector<1x128xf32>
    tpu.vector_store %arg4[%288, %c0_108], %248 {strides = array<i32>} : memref<8x128xf32, #tpu.memory_space<vmem>>, vector<1x128xf32>,
    %290 = arith.index_cast %c4_i32 : i32 to index
    %c0_109 = arith.constant 0 : index
    %291 = vector.load %arg5[%290, %c0_109] : memref<8x128xf32, #tpu.memory_space<vmem>>, vector<1x128xf32>
    tpu.vector_store %arg5[%290, %c0_109], %287 {strides = array<i32>} : memref<8x128xf32, #tpu.memory_space<vmem>>, vector<1x128xf32>,
    %c5_i32 = arith.constant 5 : i32
    %292 = arith.index_cast %c5_i32 : i32 to index
    %c0_110 = arith.constant 0 : index
    %293 = vector.load %arg1[%292, %c0_110] : memref<8x128xf32, #tpu.memory_space<vmem>>, vector<1x128xf32>
    %c10_i32_111 = arith.constant 10 : i32
    %294 = tpu.dynamic_rotate %242 by %c10_i32_111 dim 1 : vector<1x128xf32>, i32 -> vector<1x128xf32>
    %cst_112 = arith.constant 0.000000e+00 : f32
    %295 = vector.broadcast %cst_112 : f32 to vector<1x128xf32>
    %296 = arith.select %10, %294, %295 : vector<1x128xi1>, vector<1x128xf32>
    %297 = arith.select %5, %293, %296 : vector<1x128xi1>, vector<1x128xf32>
    %cst_113 = arith.constant 0.949999988 : f32
    %298 = vector.broadcast %cst_113 : f32 to vector<1x128xf32>
    %299 = arith.mulf %298, %245 : vector<1x128xf32>
    %300 = arith.addf %297, %299 : vector<1x128xf32>
    %301 = arith.addf %297, %287 : vector<1x128xf32>
    %c0_114 = arith.constant 0 : index
    %c0_115 = arith.constant 0 : index
    %302 = vector.load %arg2[%c0_114, %c0_115] : memref<128x128xf32, #tpu.memory_space<vmem>>, vector<128x128xf32>
    %cst_116 = arith.constant dense<0.000000e+00> : vector<1x128xf32>
    %303 = tpu.matmul %301, %302, %cst_116 {dimension_numbers = #tpu.dot_dimension_numbers<[1], [0], [0], [1], [0, 0, 1, 1], [], []>} : vector<1x128xf32>, vector<128x128xf32>, vector<1x128xf32> -> vector<1x128xf32>
    %304 = vector.extract_strided_slice %303 {offsets = [0, 32], sizes = [1, 5], strides = [1, 1]} : vector<1x128xf32> to vector<1x5xf32>
    %305 = vector.extract_strided_slice %303 {offsets = [0, 40], sizes = [1, 5], strides = [1, 1]} : vector<1x128xf32> to vector<1x5xf32>
    %306 = vector.extract_strided_slice %303 {offsets = [0, 48], sizes = [1, 5], strides = [1, 1]} : vector<1x128xf32> to vector<1x5xf32>
    %307 = vector.extract_strided_slice %293 {offsets = [0, 96], sizes = [1, 5], strides = [1, 1]} : vector<1x128xf32> to vector<1x5xf32>
    %308 = vector.extract_strided_slice %287 {offsets = [0, 0], sizes = [1, 5], strides = [1, 1]} : vector<1x128xf32> to vector<1x5xf32>
    %cst_117 = arith.constant 0.000000e+00 : f32
    %309 = vector.broadcast %cst_117 : f32 to vector<1x5xf32>
    %310 = arith.subf %309, %305 : vector<1x5xf32>
    %cst_118 = arith.constant 0.000000e+00 : f32
    %311 = vector.broadcast %cst_118 : f32 to vector<1x5xf32>
    %312 = arith.maximumf %310, %311 : vector<1x5xf32>
    %313 = arith.addf %304, %312 : vector<1x5xf32>
    %314 = arith.addf %313, %12 : vector<1x5xf32>
    %cst_119 = arith.constant 1.000000e-01 : f32
    %315 = vector.broadcast %cst_119 : f32 to vector<1x5xf32>
    %316 = arith.mulf %315, %314 : vector<1x5xf32>
    %cst_120 = arith.constant 1.000000e-01 : f32
    %317 = vector.broadcast %cst_120 : f32 to vector<1x5xf32>
    %318 = arith.mulf %317, %306 : vector<1x5xf32>
    %cst_121 = arith.constant 0.000000e+00 : f32
    %319 = vector.broadcast %cst_121 : f32 to vector<1x5xf32>
    %320 = arith.maximumf %305, %319 : vector<1x5xf32>
    %321 = arith.addf %320, %13 : vector<1x5xf32>
    %cst_122 = arith.constant 1.000000e-01 : f32
    %322 = vector.broadcast %cst_122 : f32 to vector<1x5xf32>
    %323 = arith.mulf %322, %321 : vector<1x5xf32>
    %324 = arith.addf %318, %323 : vector<1x5xf32>
    %cst_123 = arith.constant 1.000000e+00 : f32
    %325 = vector.broadcast %cst_123 : f32 to vector<1x5xf32>
    %326 = arith.subf %325, %308 : vector<1x5xf32>
    %327 = arith.mulf %316, %326 : vector<1x5xf32>
    %cst_124 = arith.constant 5.000000e-02 : f32
    %328 = vector.broadcast %cst_124 : f32 to vector<1x5xf32>
    %329 = arith.addf %308, %328 : vector<1x5xf32>
    %cst_125 = arith.constant 1.000000e+00 : f32
    %330 = vector.broadcast %cst_125 : f32 to vector<1x5xf32>
    %331 = arith.addf %324, %330 : vector<1x5xf32>
    %332 = arith.mulf %329, %331 : vector<1x5xf32>
    %333 = arith.subf %327, %332 : vector<1x5xf32>
    %334 = arith.addf %333, %307 : vector<1x5xf32>
    %cst_126 = arith.constant 0.00999999977 : f32
    %335 = vector.broadcast %cst_126 : f32 to vector<1x5xf32>
    %336 = arith.mulf %335, %334 : vector<1x5xf32>
    %337 = arith.addf %308, %336 : vector<1x5xf32>
    %cst_127 = arith.constant 0.000000e+00 : f32
    %cst_128 = arith.constant 1.000000e+00 : f32
    %338 = vector.broadcast %cst_127 : f32 to vector<1x5xf32>
    %339 = arith.maximumf %338, %337 : vector<1x5xf32>
    %340 = vector.broadcast %cst_128 : f32 to vector<1x5xf32>
    %341 = arith.minimumf %340, %339 : vector<1x5xf32>
    %342 = tpu.concatenate %341, %11 in 1 : vector<1x5xf32>, vector<1x123xf32> -> vector<1x128xf32>
    %343 = arith.index_cast %c5_i32 : i32 to index
    %c0_129 = arith.constant 0 : index
    %344 = vector.load %arg4[%343, %c0_129] : memref<8x128xf32, #tpu.memory_space<vmem>>, vector<1x128xf32>
    tpu.vector_store %arg4[%343, %c0_129], %303 {strides = array<i32>} : memref<8x128xf32, #tpu.memory_space<vmem>>, vector<1x128xf32>,
    %345 = arith.index_cast %c5_i32 : i32 to index
    %c0_130 = arith.constant 0 : index
    %346 = vector.load %arg5[%345, %c0_130] : memref<8x128xf32, #tpu.memory_space<vmem>>, vector<1x128xf32>
    tpu.vector_store %arg5[%345, %c0_130], %342 {strides = array<i32>} : memref<8x128xf32, #tpu.memory_space<vmem>>, vector<1x128xf32>,
    %c6_i32 = arith.constant 6 : i32
    %347 = arith.index_cast %c6_i32 : i32 to index
    %c0_131 = arith.constant 0 : index
    %348 = vector.load %arg1[%347, %c0_131] : memref<8x128xf32, #tpu.memory_space<vmem>>, vector<1x128xf32>
    %c10_i32_132 = arith.constant 10 : i32
    %349 = tpu.dynamic_rotate %297 by %c10_i32_132 dim 1 : vector<1x128xf32>, i32 -> vector<1x128xf32>
    %cst_133 = arith.constant 0.000000e+00 : f32
    %350 = vector.broadcast %cst_133 : f32 to vector<1x128xf32>
    %351 = arith.select %10, %349, %350 : vector<1x128xi1>, vector<1x128xf32>
    %352 = arith.select %5, %348, %351 : vector<1x128xi1>, vector<1x128xf32>
    %cst_134 = arith.constant 0.949999988 : f32
    %353 = vector.broadcast %cst_134 : f32 to vector<1x128xf32>
    %354 = arith.mulf %353, %300 : vector<1x128xf32>
    %355 = arith.addf %352, %354 : vector<1x128xf32>
    %356 = arith.addf %352, %342 : vector<1x128xf32>
    %c0_135 = arith.constant 0 : index
    %c0_136 = arith.constant 0 : index
    %357 = vector.load %arg2[%c0_135, %c0_136] : memref<128x128xf32, #tpu.memory_space<vmem>>, vector<128x128xf32>
    %cst_137 = arith.constant dense<0.000000e+00> : vector<1x128xf32>
    %358 = tpu.matmul %356, %357, %cst_137 {dimension_numbers = #tpu.dot_dimension_numbers<[1], [0], [0], [1], [0, 0, 1, 1], [], []>} : vector<1x128xf32>, vector<128x128xf32>, vector<1x128xf32> -> vector<1x128xf32>
    %359 = vector.extract_strided_slice %358 {offsets = [0, 32], sizes = [1, 5], strides = [1, 1]} : vector<1x128xf32> to vector<1x5xf32>
    %360 = vector.extract_strided_slice %358 {offsets = [0, 40], sizes = [1, 5], strides = [1, 1]} : vector<1x128xf32> to vector<1x5xf32>
    %361 = vector.extract_strided_slice %358 {offsets = [0, 48], sizes = [1, 5], strides = [1, 1]} : vector<1x128xf32> to vector<1x5xf32>
    %362 = vector.extract_strided_slice %348 {offsets = [0, 96], sizes = [1, 5], strides = [1, 1]} : vector<1x128xf32> to vector<1x5xf32>
    %363 = vector.extract_strided_slice %342 {offsets = [0, 0], sizes = [1, 5], strides = [1, 1]} : vector<1x128xf32> to vector<1x5xf32>
    %cst_138 = arith.constant 0.000000e+00 : f32
    %364 = vector.broadcast %cst_138 : f32 to vector<1x5xf32>
    %365 = arith.subf %364, %360 : vector<1x5xf32>
    %cst_139 = arith.constant 0.000000e+00 : f32
    %366 = vector.broadcast %cst_139 : f32 to vector<1x5xf32>
    %367 = arith.maximumf %365, %366 : vector<1x5xf32>
    %368 = arith.addf %359, %367 : vector<1x5xf32>
    %369 = arith.addf %368, %12 : vector<1x5xf32>
    %cst_140 = arith.constant 1.000000e-01 : f32
    %370 = vector.broadcast %cst_140 : f32 to vector<1x5xf32>
    %371 = arith.mulf %370, %369 : vector<1x5xf32>
    %cst_141 = arith.constant 1.000000e-01 : f32
    %372 = vector.broadcast %cst_141 : f32 to vector<1x5xf32>
    %373 = arith.mulf %372, %361 : vector<1x5xf32>
    %cst_142 = arith.constant 0.000000e+00 : f32
    %374 = vector.broadcast %cst_142 : f32 to vector<1x5xf32>
    %375 = arith.maximumf %360, %374 : vector<1x5xf32>
    %376 = arith.addf %375, %13 : vector<1x5xf32>
    %cst_143 = arith.constant 1.000000e-01 : f32
    %377 = vector.broadcast %cst_143 : f32 to vector<1x5xf32>
    %378 = arith.mulf %377, %376 : vector<1x5xf32>
    %379 = arith.addf %373, %378 : vector<1x5xf32>
    %cst_144 = arith.constant 1.000000e+00 : f32
    %380 = vector.broadcast %cst_144 : f32 to vector<1x5xf32>
    %381 = arith.subf %380, %363 : vector<1x5xf32>
    %382 = arith.mulf %371, %381 : vector<1x5xf32>
    %cst_145 = arith.constant 5.000000e-02 : f32
    %383 = vector.broadcast %cst_145 : f32 to vector<1x5xf32>
    %384 = arith.addf %363, %383 : vector<1x5xf32>
    %cst_146 = arith.constant 1.000000e+00 : f32
    %385 = vector.broadcast %cst_146 : f32 to vector<1x5xf32>
    %386 = arith.addf %379, %385 : vector<1x5xf32>
    %387 = arith.mulf %384, %386 : vector<1x5xf32>
    %388 = arith.subf %382, %387 : vector<1x5xf32>
    %389 = arith.addf %388, %362 : vector<1x5xf32>
    %cst_147 = arith.constant 0.00999999977 : f32
    %390 = vector.broadcast %cst_147 : f32 to vector<1x5xf32>
    %391 = arith.mulf %390, %389 : vector<1x5xf32>
    %392 = arith.addf %363, %391 : vector<1x5xf32>
    %cst_148 = arith.constant 0.000000e+00 : f32
    %cst_149 = arith.constant 1.000000e+00 : f32
    %393 = vector.broadcast %cst_148 : f32 to vector<1x5xf32>
    %394 = arith.maximumf %393, %392 : vector<1x5xf32>
    %395 = vector.broadcast %cst_149 : f32 to vector<1x5xf32>
    %396 = arith.minimumf %395, %394 : vector<1x5xf32>
    %397 = tpu.concatenate %396, %11 in 1 : vector<1x5xf32>, vector<1x123xf32> -> vector<1x128xf32>
    %398 = arith.index_cast %c6_i32 : i32 to index
    %c0_150 = arith.constant 0 : index
    %399 = vector.load %arg4[%398, %c0_150] : memref<8x128xf32, #tpu.memory_space<vmem>>, vector<1x128xf32>
    tpu.vector_store %arg4[%398, %c0_150], %358 {strides = array<i32>} : memref<8x128xf32, #tpu.memory_space<vmem>>, vector<1x128xf32>,
    %400 = arith.index_cast %c6_i32 : i32 to index
    %c0_151 = arith.constant 0 : index
    %401 = vector.load %arg5[%400, %c0_151] : memref<8x128xf32, #tpu.memory_space<vmem>>, vector<1x128xf32>
    tpu.vector_store %arg5[%400, %c0_151], %397 {strides = array<i32>} : memref<8x128xf32, #tpu.memory_space<vmem>>, vector<1x128xf32>,
    %c7_i32 = arith.constant 7 : i32
    %402 = arith.index_cast %c7_i32 : i32 to index
    %c0_152 = arith.constant 0 : index
    %403 = vector.load %arg1[%402, %c0_152] : memref<8x128xf32, #tpu.memory_space<vmem>>, vector<1x128xf32>
    %c10_i32_153 = arith.constant 10 : i32
    %404 = tpu.dynamic_rotate %352 by %c10_i32_153 dim 1 : vector<1x128xf32>, i32 -> vector<1x128xf32>
    %cst_154 = arith.constant 0.000000e+00 : f32
    %405 = vector.broadcast %cst_154 : f32 to vector<1x128xf32>
    %406 = arith.select %10, %404, %405 : vector<1x128xi1>, vector<1x128xf32>
    %407 = arith.select %5, %403, %406 : vector<1x128xi1>, vector<1x128xf32>
    %cst_155 = arith.constant 0.949999988 : f32
    %408 = vector.broadcast %cst_155 : f32 to vector<1x128xf32>
    %409 = arith.mulf %408, %355 : vector<1x128xf32>
    %410 = arith.addf %407, %409 : vector<1x128xf32>
    %411 = arith.addf %407, %397 : vector<1x128xf32>
    %c0_156 = arith.constant 0 : index
    %c0_157 = arith.constant 0 : index
    %412 = vector.load %arg2[%c0_156, %c0_157] : memref<128x128xf32, #tpu.memory_space<vmem>>, vector<128x128xf32>
    %cst_158 = arith.constant dense<0.000000e+00> : vector<1x128xf32>
    %413 = tpu.matmul %411, %412, %cst_158 {dimension_numbers = #tpu.dot_dimension_numbers<[1], [0], [0], [1], [0, 0, 1, 1], [], []>} : vector<1x128xf32>, vector<128x128xf32>, vector<1x128xf32> -> vector<1x128xf32>
    %414 = vector.extract_strided_slice %413 {offsets = [0, 32], sizes = [1, 5], strides = [1, 1]} : vector<1x128xf32> to vector<1x5xf32>
    %415 = vector.extract_strided_slice %413 {offsets = [0, 40], sizes = [1, 5], strides = [1, 1]} : vector<1x128xf32> to vector<1x5xf32>
    %416 = vector.extract_strided_slice %413 {offsets = [0, 48], sizes = [1, 5], strides = [1, 1]} : vector<1x128xf32> to vector<1x5xf32>
    %417 = vector.extract_strided_slice %403 {offsets = [0, 96], sizes = [1, 5], strides = [1, 1]} : vector<1x128xf32> to vector<1x5xf32>
    %418 = vector.extract_strided_slice %397 {offsets = [0, 0], sizes = [1, 5], strides = [1, 1]} : vector<1x128xf32> to vector<1x5xf32>
    %cst_159 = arith.constant 0.000000e+00 : f32
    %419 = vector.broadcast %cst_159 : f32 to vector<1x5xf32>
    %420 = arith.subf %419, %415 : vector<1x5xf32>
    %cst_160 = arith.constant 0.000000e+00 : f32
    %421 = vector.broadcast %cst_160 : f32 to vector<1x5xf32>
    %422 = arith.maximumf %420, %421 : vector<1x5xf32>
    %423 = arith.addf %414, %422 : vector<1x5xf32>
    %424 = arith.addf %423, %12 : vector<1x5xf32>
    %cst_161 = arith.constant 1.000000e-01 : f32
    %425 = vector.broadcast %cst_161 : f32 to vector<1x5xf32>
    %426 = arith.mulf %425, %424 : vector<1x5xf32>
    %cst_162 = arith.constant 1.000000e-01 : f32
    %427 = vector.broadcast %cst_162 : f32 to vector<1x5xf32>
    %428 = arith.mulf %427, %416 : vector<1x5xf32>
    %cst_163 = arith.constant 0.000000e+00 : f32
    %429 = vector.broadcast %cst_163 : f32 to vector<1x5xf32>
    %430 = arith.maximumf %415, %429 : vector<1x5xf32>
    %431 = arith.addf %430, %13 : vector<1x5xf32>
    %cst_164 = arith.constant 1.000000e-01 : f32
    %432 = vector.broadcast %cst_164 : f32 to vector<1x5xf32>
    %433 = arith.mulf %432, %431 : vector<1x5xf32>
    %434 = arith.addf %428, %433 : vector<1x5xf32>
    %cst_165 = arith.constant 1.000000e+00 : f32
    %435 = vector.broadcast %cst_165 : f32 to vector<1x5xf32>
    %436 = arith.subf %435, %418 : vector<1x5xf32>
    %437 = arith.mulf %426, %436 : vector<1x5xf32>
    %cst_166 = arith.constant 5.000000e-02 : f32
    %438 = vector.broadcast %cst_166 : f32 to vector<1x5xf32>
    %439 = arith.addf %418, %438 : vector<1x5xf32>
    %cst_167 = arith.constant 1.000000e+00 : f32
    %440 = vector.broadcast %cst_167 : f32 to vector<1x5xf32>
    %441 = arith.addf %434, %440 : vector<1x5xf32>
    %442 = arith.mulf %439, %441 : vector<1x5xf32>
    %443 = arith.subf %437, %442 : vector<1x5xf32>
    %444 = arith.addf %443, %417 : vector<1x5xf32>
    %cst_168 = arith.constant 0.00999999977 : f32
    %445 = vector.broadcast %cst_168 : f32 to vector<1x5xf32>
    %446 = arith.mulf %445, %444 : vector<1x5xf32>
    %447 = arith.addf %418, %446 : vector<1x5xf32>
    %cst_169 = arith.constant 0.000000e+00 : f32
    %cst_170 = arith.constant 1.000000e+00 : f32
    %448 = vector.broadcast %cst_169 : f32 to vector<1x5xf32>
    %449 = arith.maximumf %448, %447 : vector<1x5xf32>
    %450 = vector.broadcast %cst_170 : f32 to vector<1x5xf32>
    %451 = arith.minimumf %450, %449 : vector<1x5xf32>
    %452 = tpu.concatenate %451, %11 in 1 : vector<1x5xf32>, vector<1x123xf32> -> vector<1x128xf32>
    %453 = arith.index_cast %c7_i32 : i32 to index
    %c0_171 = arith.constant 0 : index
    %454 = vector.load %arg4[%453, %c0_171] : memref<8x128xf32, #tpu.memory_space<vmem>>, vector<1x128xf32>
    tpu.vector_store %arg4[%453, %c0_171], %413 {strides = array<i32>} : memref<8x128xf32, #tpu.memory_space<vmem>>, vector<1x128xf32>,
    %455 = arith.index_cast %c7_i32 : i32 to index
    %c0_172 = arith.constant 0 : index
    %456 = vector.load %arg5[%455, %c0_172] : memref<8x128xf32, #tpu.memory_space<vmem>>, vector<1x128xf32>
    tpu.vector_store %arg5[%455, %c0_172], %452 {strides = array<i32>} : memref<8x128xf32, #tpu.memory_space<vmem>>, vector<1x128xf32>,
    %c8_i32 = arith.constant 8 : i32
    %c0_173 = arith.constant 0 : index
    %c0_174 = arith.constant 0 : index
    %457 = vector.load %arg6[%c0_173, %c0_174] : memref<3x128xf32, #tpu.memory_space<vmem>>, vector<1x128xf32>
    tpu.vector_store %arg6[%c0_173, %c0_174], %407 {strides = array<i32>} : memref<3x128xf32, #tpu.memory_space<vmem>>, vector<1x128xf32>,
    %c1_175 = arith.constant 1 : index
    %c0_176 = arith.constant 0 : index
    %458 = vector.load %arg6[%c1_175, %c0_176] : memref<3x128xf32, #tpu.memory_space<vmem>>, vector<1x128xf32>
    tpu.vector_store %arg6[%c1_175, %c0_176], %410 {strides = array<i32>} : memref<3x128xf32, #tpu.memory_space<vmem>>, vector<1x128xf32>,
    %c2_177 = arith.constant 2 : index
    %c0_178 = arith.constant 0 : index
    %459 = vector.load %arg6[%c2_177, %c0_178] : memref<3x128xf32, #tpu.memory_space<vmem>>, vector<1x128xf32>
    tpu.vector_store %arg6[%c2_177, %c0_178], %452 {strides = array<i32>} : memref<3x128xf32, #tpu.memory_space<vmem>>, vector<1x128xf32>,
    return
  }
  func.func @transform_0(%arg0: i32) -> (i32, i32) {
    %c0_i32 = arith.constant 0 : i32
    %c0_i32_0 = arith.constant 0 : i32
    %c0_i32_1 = arith.constant 0 : i32
    return %c0_i32, %c0_i32_0 : i32, i32
  }
  func.func @transform_1(%arg0: i32) -> (i32, i32) {
    %c0_i32 = arith.constant 0 : i32
    %c0_i32_0 = arith.constant 0 : i32
    %c0_i32_1 = arith.constant 0 : i32
    return %c0_i32, %c0_i32_0 : i32, i32
  }
  func.func @transform_2(%arg0: i32) -> (i32, i32) {
    %c0_i32 = arith.constant 0 : i32
    %c0_i32_0 = arith.constant 0 : i32
    %c0_i32_1 = arith.constant 0 : i32
    return %c0_i32, %c0_i32_0 : i32, i32
  }
  func.func @transform_3(%arg0: i32) -> (i32, i32) {
    %c0_i32 = arith.constant 0 : i32
    %c0_i32_0 = arith.constant 0 : i32
    %c0_i32_1 = arith.constant 0 : i32
    return %c0_i32, %c0_i32_0 : i32, i32
  }
  func.func @transform_4(%arg0: i32) -> (i32, i32) {
    %c0_i32 = arith.constant 0 : i32
    %c0_i32_0 = arith.constant 0 : i32
    %c0_i32_1 = arith.constant 0 : i32
    return %c0_i32, %c0_i32_0 : i32, i32
  }
  func.func @transform_5(%arg0: i32) -> (i32, i32) {
    %c0_i32 = arith.constant 0 : i32
    %c0_i32_0 = arith.constant 0 : i32
    %c0_i32_1 = arith.constant 0 : i32
    return %c0_i32, %c0_i32_0 : i32, i32
  }
}

</mosaic_0001>

<llo_original>
// kernel: squeeze.3
$region0: #{squeeze.3}
  %s0 = inlined_call_operand.vmem [shape: f32[50], index: 0, kind: input, shape index: {}]
  %s1 = inlined_call_operand.hbm [shape: f32[5,10], index: 1, kind: output, shape index: {}]
  $region1: #{squeeze.3} parent=0
    #allocation0 [shape = 'u8[4096]{0}', space=vmem, size = 0x1000, scoped, tag = 'operand span for operand 1']
    #allocation1 [shape = 's32[1]{0}', space=sflag, size = 0x4, scoped, tag = 'scoped memory for squeeze.3']
    #allocation2 [shape = 'u8[4096]{0}', space=vmem, size = 0x1000, scoped, tag = 'scoped mem for input reshape']
    %2 = vsyncpa [#allocation1], 0
    %s4 = sshllo.u32 0, 1
    %v5 = vld [vmem:[%s0] sm:%s4]
    %6 = vst [vmem:[#allocation2] sm:%s4] %v5
    %v7 = vld [vmem:[#allocation2] sm:$0x1]
    %vm8 = vcmask 80896
    %9 = vst.msk [vmem:[#allocation0] sm:$0x1] %vm8, %v7
    %v10 = vld [vmem:[#allocation2] sm:$0x1]
    %11 = vrot.lane.b32.xlu0 %v10, 118
    %v12 = vpop.permute.xlu0 %11
    %vm13 = vcmask 80896
    %s14 = scalar_lea.vmem [#allocation0], 1
    %15 = vst.msk [vmem:[%s14] sm:$0x1] %vm13, %v12
    %v16 = vld [vmem:[#allocation2] sm:$0x1]
    %17 = vrot.lane.b32.xlu0 %v16, 108
    %v18 = vpop.permute.xlu0 %17
    %vm19 = vcmask 80896
    %s20 = scalar_lea.vmem [#allocation0], 2
    %21 = vst.msk [vmem:[%s20] sm:$0x1] %vm19, %v18
    %v22 = vld [vmem:[#allocation2] sm:$0x1]
    %23 = vrot.lane.b32.xlu0 %v22, 98
    %v24 = vpop.permute.xlu0 %23
    %vm25 = vcmask 80896
    %s26 = scalar_lea.vmem [#allocation0], 3
    %27 = vst.msk [vmem:[%s26] sm:$0x1] %vm25, %v24
    %v28 = vld [vmem:[#allocation2] sm:$0x1]
    %29 = vrot.lane.b32.xlu0 %v28, 88
    %v30 = vpop.permute.xlu0 %29
    %vm31 = vcmask 80896
    %s32 = scalar_lea.vmem [#allocation0], 4
    %33 = vst.msk [vmem:[%s32] sm:$0x1] %vm31, %v30
    %s35 = ssub.s32 128, 128
    %36 = vsyncadd [#allocation1], %s35
    %s38 = sshll.u32 [#allocation0], 4
    %s39 = int_to_ptr.vmem [resolvable:$true] %s38
    %41 = dma.vmem_to_hbm [thread:$0]  %s39, 128, %s1, [#allocation1]
    %42 = dma.done [#allocation1], 128
    %43 = vsyncpa [#allocation1], 1

// kernel: pro_control_forward_seq.1
$region0: #{pro_control_forward_seq.1}
  #allocation0 [shape = 'u32[]', space=smem, size = 0x4, offset = 0x4, fixed_abs, tag = 'smem constant byte address 0x4 - core index']
  #allocation1 [shape = 'u32[144,128]{1,0:T(1,128)}', space=vmem, size = 0x12000, scoped, tag = 'internal scratch']
  %s0 = inlined_call_operand.vmem [shape: f32[8,128], index: 0, kind: input, shape index: {}]
  %s1 = inlined_call_operand.vmem [shape: f32[128,128], index: 1, kind: input, shape index: {}]
  %s2 = inlined_call_operand.vmem [shape: f32[3,128], index: 2, kind: input, shape index: {}, may-alias: {2,5}]
  %s3 = inlined_call_operand.vmem [shape: f32[8,128], index: 3, kind: output, shape index: {0}]
  %s4 = inlined_call_operand.vmem [shape: f32[8,128], index: 4, kind: output, shape index: {1}]
  %s5 = inlined_call_operand.vmem [shape: f32[3,128], index: 5, kind: output, shape index: {2}, may-alias: {2,5}]
  %6 = xla_tuple %s3, %s4, %s5
  %s7 = sld [smem:[#allocation0]]
  $region38: #{pro_control_forward_seq.1} parent=0
    _
  %s9 = ssub.s32 1, %s7
  %s10 = scalar_select 0, %s9, %s7
  // Predicated region
  $region2: #{pro_control_forward_seq.1} parent=0 // pred_check
    _
  $region3: #{pro_control_forward_seq.1} parent=0 // pred_check_branch
    %12 = sbr.rel (0) target = $region5
  $region4: #{pro_control_forward_seq.1} parent=0 // pred_region
    _
  $region5: #{pro_control_forward_seq.1} parent=0 // pred_fallthru
    _
  // Predicated region
  $region6: #{pro_control_forward_seq.1} parent=0 // pred_check
    _
  $region7: #{pro_control_forward_seq.1} parent=0 // pred_check_branch
    %14 = sbr.rel (0) target = $region9
  $region8: #{pro_control_forward_seq.1} parent=0 // pred_region
    _
  $region9: #{pro_control_forward_seq.1} parent=0 // pred_fallthru
    _
  // Predicated region
  $region10: #{pro_control_forward_seq.1} parent=0 // pred_check
    _
  $region11: #{pro_control_forward_seq.1} parent=0 // pred_check_branch
    %16 = sbr.rel (0) target = $region13
  $region12: #{pro_control_forward_seq.1} parent=0 // pred_region
    _
  $region13: #{pro_control_forward_seq.1} parent=0 // pred_fallthru
    _
  %v17 = vlaneseq
  %v18 = vand.u32 %v17, 127
  %vm19 = vcmp.ge.s32.totalorder %v18, 16
  %vm20 = vcmp.lt.s32.totalorder %v18, 26
  %vm21 = vmand %vm19, %vm20
  %vm22 = vcmp.lt.s32.totalorder %v18, 66
  %vm23 = vmand %vm19, %vm22
  %v24 = vld [vmem:[%s1 + $0x7e] sm:$0x1]
  %v25 = vld [vmem:[%s1 + $0x7f] sm:$0x1]
  %v26 = vld [vmem:[%s2] sm:$0x1]
  %v27 = vld [vmem:[%s2 + $0x1] sm:$0x1]
  %v28 = vld [vmem:[%s2 + $0x2] sm:$0x1]
  %v29 = vld [vmem:[%s0] sm:$0x1]
  %30 = vrot.lane.b32.xlu0 %v26, 10
  %v31 = vpop.permute.xlu0 %30
  %v32 = vsel %vm23, %v31, 0.0
  %v33 = vsel %vm21, %v29, %v32
  %v34 = vmul.f32 %v27, 0.95
  %v35 = vadd.f32 %v33, %v34
  %v36 = vadd.f32 %v33, %v28
  %v37 = vld [vmem:[%s1] sm:$0xff]
  %v38 = vld [vmem:[%s1 + $0x8] sm:$0xff]
  %v39 = vld [vmem:[%s1 + $0x10] sm:$0xff]
  %v40 = vld [vmem:[%s1 + $0x18] sm:$0xff]
  %v41 = vld [vmem:[%s1 + $0x20] sm:$0xff]
  %v42 = vld [vmem:[%s1 + $0x28] sm:$0xff]
  %v43 = vld [vmem:[%s1 + $0x30] sm:$0xff]
  %v44 = vld [vmem:[%s1 + $0x38] sm:$0xff]
  %v45 = vld [vmem:[%s1 + $0x40] sm:$0xff]
  %v46 = vld [vmem:[%s1 + $0x48] sm:$0xff]
  %v47 = vld [vmem:[%s1 + $0x50] sm:$0xff]
  %v48 = vld [vmem:[%s1 + $0x58] sm:$0xff]
  %v49 = vld [vmem:[%s1 + $0x60] sm:$0xff]
  %v50 = vld [vmem:[%s1 + $0x68] sm:$0xff]
  %v51 = vld [vmem:[%s1 + $0x70] sm:$0xff]
  %v52 = vld [vmem:[%s1 + $0x78] sm:$0xff]
  %53 = vmatprep.subr.mxu0 0.0
  %54 = vmatpush1.msra.mxu0 %v37
  %55 = vmatprep.subr.mxu0 0.0
  %56 = vmatpush1.msra.mxu0 %v38
  %57 = vmatprep.subr.mxu0 0.0
  %58 = vmatpush1.msra.mxu0 %v39
  %59 = vmatprep.subr.mxu0 0.0
  %60 = vmatpush1.msra.mxu0 %v40
  %61 = vmatprep.subr.mxu0 0.0
  %62 = vmatpush1.msra.mxu0 %v41
  %63 = vmatprep.subr.mxu0 0.0
  %64 = vmatpush1.msra.mxu0 %v42
  %65 = vmatprep.subr.mxu0 0.0
  %66 = vmatpush1.msra.mxu0 %v43
  %67 = vmatprep.subr.mxu0 0.0
  %68 = vmatpush1.msra.mxu0 %v44
  %69 = vmatprep.subr.mxu0 0.0
  %70 = vmatpush1.msra.mxu0 %v45
  %71 = vmatprep.subr.mxu0 0.0
  %72 = vmatpush1.msra.mxu0 %v46
  %73 = vmatprep.subr.mxu0 0.0
  %74 = vmatpush1.msra.mxu0 %v47
  %75 = vmatprep.subr.mxu0 0.0
  %76 = vmatpush1.msra.mxu0 %v48
  %77 = vmatprep.subr.mxu0 0.0
  %78 = vmatpush1.msra.mxu0 %v49
  %79 = vmatprep.subr.mxu0 0.0
  %80 = vmatpush1.msra.mxu0 %v50
  %81 = vmatprep.subr.mxu0 0.0
  %82 = vmatpush1.msra.mxu0 %v51
  %83 = vmatprep.subr.mxu0 0.0
  %84 = vmatpush1.msra.mxu0 %v52
  %85 = vmatprep.subr.mxu0 0.0
  %86 = vmatpush1.msra.mxu0 0.0
  %87 = vmatprep.subr.mxu0 0.0
  %88 = vmatpush1.msra.mxu0 0.0
  %89 = vmatprep.subr.mxu0 0.0
  %90 = vmatpush1.msra.mxu0 0.0
  %91 = vmatprep.subr.mxu0 0.0
  %92 = vmatpush1.msra.mxu0 0.0
  %93 = vmatprep.subr.mxu0 0.0
  %94 = vmatpush1.msra.mxu0 0.0
  %95 = vmatprep.subr.mxu0 0.0
  %96 = vmatpush1.msra.mxu0 0.0
  %97 = vmatprep.subr.mxu0 0.0
  %98 = vmatpush1.msra.mxu0 0.0
  %99 = vmatprep.subr.mxu0 0.0
  %100 = vmatpush1.msra.mxu0 0.0
  %101 = vmatprep.subr.mxu0 0.0
  %102 = vmatpush1.msra.mxu0 0.0
  %103 = vmatprep.subr.mxu0 0.0
  %104 = vmatpush1.msra.mxu0 0.0
  %105 = vmatprep.subr.mxu0 0.0
  %106 = vmatpush1.msra.mxu0 0.0
  %107 = vmatprep.subr.mxu0 0.0
  %108 = vmatpush1.msra.mxu0 0.0
  %109 = vmatprep.subr.mxu0 0.0
  %110 = vmatpush1.msra.mxu0 0.0
  %111 = vmatprep.subr.mxu0 0.0
  %112 = vmatpush1.msra.mxu0 0.0
  %113 = vmatprep.subr.mxu0 0.0
  %114 = vmatpush1.msra.mxu0 0.0
  %115 = vmatprep.subr.mxu0 0.0
  %116 = vmatpush1.msra.mxu0 0.0
  %117 = vmatprep.mubr.f32.mxu0 0.0
  %118 = vmatmul.mubr.f32.gmra.mrb[0].mxu0 %v36
  %v119 = vpop.f32.mrb[0].mxu0
  %v120 = vadd.f32 0.0, %v119
  %v121 = vpop.f32.mrb[0].mxu0
  %122 = vdwg.mxu0
  %v123 = vsub.f32 0.0, %v120
  %v124 = vmax.f32 %v123, 0.0
  %126 = vrot.lane.b32.xlu0 %v124, 120
  %v127 = vpop.permute.xlu0 %126
  %v129 = vadd.f32 %v120, %v127
  %131 = vrot.lane.b32.xlu0 %v24, 32
  %v132 = vpop.permute.xlu0 %131
  %v134 = vadd.f32 %v129, %v132
  %v135 = vmul.f32 %v134, 0.1
  %v136 = vmul.f32 %v120, 0.1
  %v137 = vmax.f32 %v120, 0.0
  %139 = vrot.lane.b32.xlu0 %v25, 40
  %v140 = vpop.permute.xlu0 %139
  %v142 = vadd.f32 %v137, %v140
  %v143 = vmul.f32 %v142, 0.1
  %145 = vrot.lane.b32.xlu0 %v143, 8
  %v146 = vpop.permute.xlu0 %145
  %v148 = vadd.f32 %v136, %v146
  %v149 = vsub.f32 1.0, %v28
  %151 = vrot.lane.b32.xlu0 %v149, 32
  %v152 = vpop.permute.xlu0 %151
  %v154 = vmul.f32 %v135, %v152
  %v155 = vadd.f32 %v28, 0.05
  %v156 = vadd.f32 %v148, 1.0
  %158 = vrot.lane.b32.xlu0 %v156, 80
  %v159 = vpop.permute.xlu0 %158
  %v161 = vmul.f32 %v155, %v159
  %163 = vrot.lane.b32.xlu0 %v161, 32
  %v164 = vpop.permute.xlu0 %163
  %v166 = vsub.f32 %v154, %v164
  %168 = vrot.lane.b32.xlu0 %v29, 64
  %v169 = vpop.permute.xlu0 %168
  %v171 = vadd.f32 %v166, %v169
  %v172 = vmul.f32 %v171, 0.01
  %174 = vrot.lane.b32.xlu0 %v172, 96
  %v175 = vpop.permute.xlu0 %174
  %v177 = vadd.f32 %v28, %v175
  %v178 = vmax.f32 %v177, 0.0
  %v179 = vmin.f32 %v178, 1.0
  %vm180 = vcmask 39936
  %v181 = vsel %vm180, %v179, 0.0
  %182 = vst [vmem:[%s3] sm:$0x1] %v120
  %183 = vst [vmem:[%s4] sm:$0x1] %v181
  %v184 = vld [vmem:[%s0 + $0x1] sm:$0x1]
  %185 = vrot.lane.b32.xlu0 %v33, 10
  %v186 = vpop.permute.xlu0 %185
  %v187 = vsel %vm23, %v186, 0.0
  %v188 = vsel %vm21, %v184, %v187
  %v189 = vmul.f32 %v35, 0.95
  %v190 = vadd.f32 %v188, %v189
  %v191 = vadd.f32 %v188, %v181
  %v192 = vld [vmem:[%s1] sm:$0xff]
  %v193 = vld [vmem:[%s1 + $0x8] sm:$0xff]
  %v194 = vld [vmem:[%s1 + $0x10] sm:$0xff]
  %v195 = vld [vmem:[%s1 + $0x18] sm:$0xff]
  %v196 = vld [vmem:[%s1 + $0x20] sm:$0xff]
  %v197 = vld [vmem:[%s1 + $0x28] sm:$0xff]
  %v198 = vld [vmem:[%s1 + $0x30] sm:$0xff]
  %v199 = vld [vmem:[%s1 + $0x38] sm:$0xff]
  %v200 = vld [vmem:[%s1 + $0x40] sm:$0xff]
  %v201 = vld [vmem:[%s1 + $0x48] sm:$0xff]
  %v202 = vld [vmem:[%s1 + $0x50] sm:$0xff]
  %v203 = vld [vmem:[%s1 + $0x58] sm:$0xff]
  %v204 = vld [vmem:[%s1 + $0x60] sm:$0xff]
  %v205 = vld [vmem:[%s1 + $0x68] sm:$0xff]
  %v206 = vld [vmem:[%s1 + $0x70] sm:$0xff]
  %v207 = vld [vmem:[%s1 + $0x78] sm:$0xff]
  %208 = vmatprep.subr.mxu0 0.0
  %209 = vmatpush1.msra.mxu0 %v192
  %210 = vmatprep.subr.mxu0 0.0
  %211 = vmatpush1.msra.mxu0 %v193
  %212 = vmatprep.subr.mxu0 0.0
  %213 = vmatpush1.msra.mxu0 %v194
  %214 = vmatprep.subr.mxu0 0.0
  %215 = vmatpush1.msra.mxu0 %v195
  %216 = vmatprep.subr.mxu0 0.0
  %217 = vmatpush1.msra.mxu0 %v196
  %218 = vmatprep.subr.mxu0 0.0
  %219 = vmatpush1.msra.mxu0 %v197
  %220 = vmatprep.subr.mxu0 0.0
  %221 = vmatpush1.msra.mxu0 %v198
  %222 = vmatprep.subr.mxu0 0.0
  %223 = vmatpush1.msra.mxu0 %v199
  %224 = vmatprep.subr.mxu0 0.0
  %225 = vmatpush1.msra.mxu0 %v200
  %226 = vmatprep.subr.mxu0 0.0
  %227 = vmatpush1.msra.mxu0 %v201
  %228 = vmatprep.subr.mxu0 0.0
  %229 = vmatpush1.msra.mxu0 %v202
  %230 = vmatprep.subr.mxu0 0.0
  %231 = vmatpush1.msra.mxu0 %v203
  %232 = vmatprep.subr.mxu0 0.0
  %233 = vmatpush1.msra.mxu0 %v204
  %234 = vmatprep.subr.mxu0 0.0
  %235 = vmatpush1.msra.mxu0 %v205
  %236 = vmatprep.subr.mxu0 0.0
  %237 = vmatpush1.msra.mxu0 %v206
  %238 = vmatprep.subr.mxu0 0.0
  %239 = vmatpush1.msra.mxu0 %v207
  %240 = vmatprep.subr.mxu0 0.0
  %241 = vmatpush1.msra.mxu0 0.0
  %242 = vmatprep.subr.mxu0 0.0
  %243 = vmatpush1.msra.mxu0 0.0
  %244 = vmatprep.subr.mxu0 0.0
  %245 = vmatpush1.msra.mxu0 0.0
  %246 = vmatprep.subr.mxu0 0.0
  %247 = vmatpush1.msra.mxu0 0.0
  %248 = vmatprep.subr.mxu0 0.0
  %249 = vmatpush1.msra.mxu0 0.0
  %250 = vmatprep.subr.mxu0 0.0
  %251 = vmatpush1.msra.mxu0 0.0
  %252 = vmatprep.subr.mxu0 0.0
  %253 = vmatpush1.msra.mxu0 0.0
  %254 = vmatprep.subr.mxu0 0.0
  %255 = vmatpush1.msra.mxu0 0.0
  %256 = vmatprep.subr.mxu0 0.0
  %257 = vmatpush1.msra.mxu0 0.0
  %258 = vmatprep.subr.mxu0 0.0
  %259 = vmatpush1.msra.mxu0 0.0
  %260 = vmatprep.subr.mxu0 0.0
  %261 = vmatpush1.msra.mxu0 0.0
  %262 = vmatprep.subr.mxu0 0.0
  %263 = vmatpush1.msra.mxu0 0.0
  %264 = vmatprep.subr.mxu0 0.0
  %265 = vmatpush1.msra.mxu0 0.0
  %266 = vmatprep.subr.mxu0 0.0
  %267 = vmatpush1.msra.mxu0 0.0
  %268 = vmatprep.subr.mxu0 0.0
  %269 = vmatpush1.msra.mxu0 0.0
  %270 = vmatprep.subr.mxu0 0.0
  %271 = vmatpush1.msra.mxu0 0.0
  %272 = vmatprep.mubr.f32.mxu0 0.0
  %273 = vmatmul.mubr.f32.gmra.mrb[0].mxu0 %v191
  %v274 = vpop.f32.mrb[0].mxu0
  %v275 = vadd.f32 0.0, %v274
  %v276 = vpop.f32.mrb[0].mxu0
  %277 = vdwg.mxu0
  %v278 = vsub.f32 0.0, %v275
  %v279 = vmax.f32 %v278, 0.0
  %281 = vrot.lane.b32.xlu0 %v279, 120
  %v282 = vpop.permute.xlu0 %281
  %v284 = vadd.f32 %v275, %v282
  %v285 = vadd.f32 %v284, %v132
  %v286 = vmul.f32 %v285, 0.1
  %v287 = vmul.f32 %v275, 0.1
  %v288 = vmax.f32 %v275, 0.0
  %v289 = vadd.f32 %v288, %v140
  %v290 = vmul.f32 %v289, 0.1
  %292 = vrot.lane.b32.xlu0 %v290, 8
  %v293 = vpop.permute.xlu0 %292
  %v295 = vadd.f32 %v287, %v293
  %v296 = vsub.f32 1.0, %v181
  %298 = vrot.lane.b32.xlu0 %v296, 32
  %v299 = vpop.permute.xlu0 %298
  %v301 = vmul.f32 %v286, %v299
  %v302 = vadd.f32 %v181, 0.05
  %v303 = vadd.f32 %v295, 1.0
  %305 = vrot.lane.b32.xlu0 %v303, 80
  %v306 = vpop.permute.xlu0 %305
  %v308 = vmul.f32 %v302, %v306
  %310 = vrot.lane.b32.xlu0 %v308, 32
  %v311 = vpop.permute.xlu0 %310
  %v313 = vsub.f32 %v301, %v311
  %315 = vrot.lane.b32.xlu0 %v184, 64
  %v316 = vpop.permute.xlu0 %315
  %v318 = vadd.f32 %v313, %v316
  %v319 = vmul.f32 %v318, 0.01
  %321 = vrot.lane.b32.xlu0 %v319, 96
  %v322 = vpop.permute.xlu0 %321
  %v324 = vadd.f32 %v181, %v322
  %v325 = vmax.f32 %v324, 0.0
  %v326 = vmin.f32 %v325, 1.0
  %v327 = vsel %vm180, %v326, 0.0
  %328 = vst [vmem:[%s3 + $0x1] sm:$0x1] %v275
  %329 = vst [vmem:[%s4 + $0x1] sm:$0x1] %v327
  %v330 = vld [vmem:[%s0 + $0x2] sm:$0x1]
  %331 = vrot.lane.b32.xlu0 %v188, 10
  %v332 = vpop.permute.xlu0 %331
  %v333 = vsel %vm23, %v332, 0.0
  %v334 = vsel %vm21, %v330, %v333
  %v335 = vmul.f32 %v190, 0.95
  %v336 = vadd.f32 %v334, %v335
  %v337 = vadd.f32 %v334, %v327
  %v338 = vld [vmem:[%s1] sm:$0xff]
  %v339 = vld [vmem:[%s1 + $0x8] sm:$0xff]
  %v340 = vld [vmem:[%s1 + $0x10] sm:$0xff]
  %v341 = vld [vmem:[%s1 + $0x18] sm:$0xff]
  %v342 = vld [vmem:[%s1 + $0x20] sm:$0xff]
  %v343 = vld [vmem:[%s1 + $0x28] sm:$0xff]
  %v344 = vld [vmem:[%s1 + $0x30] sm:$0xff]
  %v345 = vld [vmem:[%s1 + $0x38] sm:$0xff]
  %v346 = vld [vmem:[%s1 + $0x40] sm:$0xff]
  %v347 = vld [vmem:[%s1 + $0x48] sm:$0xff]
  %v348 = vld [vmem:[%s1 + $0x50] sm:$0xff]
  %v349 = vld [vmem:[%s1 + $0x58] sm:$0xff]
  %v350 = vld [vmem:[%s1 + $0x60] sm:$0xff]
  %v351 = vld [vmem:[%s1 + $0x68] sm:$0xff]
  %v352 = vld [vmem:[%s1 + $0x70] sm:$0xff]
  %v353 = vld [vmem:[%s1 + $0x78] sm:$0xff]
  %354 = vmatprep.subr.mxu0 0.0
  %355 = vmatpush1.msra.mxu0 %v338
  %356 = vmatprep.subr.mxu0 0.0
  %357 = vmatpush1.msra.mxu0 %v339
  %358 = vmatprep.subr.mxu0 0.0
  %359 = vmatpush1.msra.mxu0 %v340
  %360 = vmatprep.subr.mxu0 0.0
  %361 = vmatpush1.msra.mxu0 %v341
  %362 = vmatprep.subr.mxu0 0.0
  %363 = vmatpush1.msra.mxu0 %v342
  %364 = vmatprep.subr.mxu0 0.0
  %365 = vmatpush1.msra.mxu0 %v343
  %366 = vmatprep.subr.mxu0 0.0
  %367 = vmatpush1.msra.mxu0 %v344
  %368 = vmatprep.subr.mxu0 0.0
  %369 = vmatpush1.msra.mxu0 %v345
  %370 = vmatprep.subr.mxu0 0.0
  %371 = vmatpush1.msra.mxu0 %v346
  %372 = vmatprep.subr.mxu0 0.0
  %373 = vmatpush1.msra.mxu0 %v347
  %374 = vmatprep.subr.mxu0 0.0
  %375 = vmatpush1.msra.mxu0 %v348
  %376 = vmatprep.subr.mxu0 0.0
  %377 = vmatpush1.msra.mxu0 %v349
  %378 = vmatprep.subr.mxu0 0.0
  %379 = vmatpush1.msra.mxu0 %v350
  %380 = vmatprep.subr.mxu0 0.0
  %381 = vmatpush1.msra.mxu0 %v351
  %382 = vmatprep.subr.mxu0 0.0
  %383 = vmatpush1.msra.mxu0 %v352
  %384 = vmatprep.subr.mxu0 0.0
  %385 = vmatpush1.msra.mxu0 %v353
  %386 = vmatprep.subr.mxu0 0.0
  %387 = vmatpush1.msra.mxu0 0.0
  %388 = vmatprep.subr.mxu0 0.0
  %389 = vmatpush1.msra.mxu0 0.0
  %390 = vmatprep.subr.mxu0 0.0
  %391 = vmatpush1.msra.mxu0 0.0
  %392 = vmatprep.subr.mxu0 0.0
  %393 = vmatpush1.msra.mxu0 0.0
  %394 = vmatprep.subr.mxu0 0.0
  %395 = vmatpush1.msra.mxu0 0.0
  %396 = vmatprep.subr.mxu0 0.0
  %397 = vmatpush1.msra.mxu0 0.0
  %398 = vmatprep.subr.mxu0 0.0
  %399 = vmatpush1.msra.mxu0 0.0
  %400 = vmatprep.subr.mxu0 0.0
  %401 = vmatpush1.msra.mxu0 0.0
  %402 = vmatprep.subr.mxu0 0.0
  %403 = vmatpush1.msra.mxu0 0.0
  %404 = vmatprep.subr.mxu0 0.0
  %405 = vmatpush1.msra.mxu0 0.0
  %406 = vmatprep.subr.mxu0 0.0
  %407 = vmatpush1.msra.mxu0 0.0
  %408 = vmatprep.subr.mxu0 0.0
  %409 = vmatpush1.msra.mxu0 0.0
  %410 = vmatprep.subr.mxu0 0.0
  %411 = vmatpush1.msra.mxu0 0.0
  %412 = vmatprep.subr.mxu0 0.0
  %413 = vmatpush1.msra.mxu0 0.0
  %414 = vmatprep.subr.mxu0 0.0
  %415 = vmatpush1.msra.mxu0 0.0
  %416 = vmatprep.subr.mxu0 0.0
  %417 = vmatpush1.msra.mxu0 0.0
  %418 = vmatprep.mubr.f32.mxu0 0.0
  %419 = vmatmul.mubr.f32.gmra.mrb[0].mxu0 %v337
  %v420 = vpop.f32.mrb[0].mxu0
  %v421 = vadd.f32 0.0, %v420
  %v422 = vpop.f32.mrb[0].mxu0
  %423 = vdwg.mxu0
  %v424 = vsub.f32 0.0, %v421
  %v425 = vmax.f32 %v424, 0.0
  %427 = vrot.lane.b32.xlu0 %v425, 120
  %v428 = vpop.permute.xlu0 %427
  %v430 = vadd.f32 %v421, %v428
  %v431 = vadd.f32 %v430, %v132
  %v432 = vmul.f32 %v431, 0.1
  %v433 = vmul.f32 %v421, 0.1
  %v434 = vmax.f32 %v421, 0.0
  %v435 = vadd.f32 %v434, %v140
  %v436 = vmul.f32 %v435, 0.1
  %438 = vrot.lane.b32.xlu0 %v436, 8
  %v439 = vpop.permute.xlu0 %438
  %v441 = vadd.f32 %v433, %v439
  %v442 = vsub.f32 1.0, %v327
  %444 = vrot.lane.b32.xlu0 %v442, 32
  %v445 = vpop.permute.xlu0 %444
  %v447 = vmul.f32 %v432, %v445
  %v448 = vadd.f32 %v327, 0.05
  %v449 = vadd.f32 %v441, 1.0
  %451 = vrot.lane.b32.xlu0 %v449, 80
  %v452 = vpop.permute.xlu0 %451
  %v454 = vmul.f32 %v448, %v452
  %456 = vrot.lane.b32.xlu0 %v454, 32
  %v457 = vpop.permute.xlu0 %456
  %v459 = vsub.f32 %v447, %v457
  %461 = vrot.lane.b32.xlu0 %v330, 64
  %v462 = vpop.permute.xlu0 %461
  %v464 = vadd.f32 %v459, %v462
  %v465 = vmul.f32 %v464, 0.01
  %467 = vrot.lane.b32.xlu0 %v465, 96
  %v468 = vpop.permute.xlu0 %467
  %v470 = vadd.f32 %v327, %v468
  %v471 = vmax.f32 %v470, 0.0
  %v472 = vmin.f32 %v471, 1.0
  %v473 = vsel %vm180, %v472, 0.0
  %474 = vst [vmem:[%s3 + $0x2] sm:$0x1] %v421
  %475 = vst [vmem:[%s4 + $0x2] sm:$0x1] %v473
  %v476 = vld [vmem:[%s0 + $0x3] sm:$0x1]
  %477 = vrot.lane.b32.xlu0 %v334, 10
  %v478 = vpop.permute.xlu0 %477
  %v479 = vsel %vm23, %v478, 0.0
  %v480 = vsel %vm21, %v476, %v479
  %v481 = vmul.f32 %v336, 0.95
  %v482 = vadd.f32 %v480, %v481
  %v483 = vadd.f32 %v480, %v473
  %v484 = vld [vmem:[%s1] sm:$0xff]
  %v485 = vld [vmem:[%s1 + $0x8] sm:$0xff]
  %v486 = vld [vmem:[%s1 + $0x10] sm:$0xff]
  %v487 = vld [vmem:[%s1 + $0x18] sm:$0xff]
  %v488 = vld [vmem:[%s1 + $0x20] sm:$0xff]
  %v489 = vld [vmem:[%s1 + $0x28] sm:$0xff]
  %v490 = vld [vmem:[%s1 + $0x30] sm:$0xff]
  %v491 = vld [vmem:[%s1 + $0x38] sm:$0xff]
  %v492 = vld [vmem:[%s1 + $0x40] sm:$0xff]
  %v493 = vld [vmem:[%s1 + $0x48] sm:$0xff]
  %v494 = vld [vmem:[%s1 + $0x50] sm:$0xff]
  %v495 = vld [vmem:[%s1 + $0x58] sm:$0xff]
  %v496 = vld [vmem:[%s1 + $0x60] sm:$0xff]
  %v497 = vld [vmem:[%s1 + $0x68] sm:$0xff]
  %v498 = vld [vmem:[%s1 + $0x70] sm:$0xff]
  %v499 = vld [vmem:[%s1 + $0x78] sm:$0xff]
  %500 = vmatprep.subr.mxu0 0.0
  %501 = vmatpush1.msra.mxu0 %v484
  %502 = vmatprep.subr.mxu0 0.0
  %503 = vmatpush1.msra.mxu0 %v485
  %504 = vmatprep.subr.mxu0 0.0
  %505 = vmatpush1.msra.mxu0 %v486
  %506 = vmatprep.subr.mxu0 0.0
  %507 = vmatpush1.msra.mxu0 %v487
  %508 = vmatprep.subr.mxu0 0.0
  %509 = vmatpush1.msra.mxu0 %v488
  %510 = vmatprep.subr.mxu0 0.0
  %511 = vmatpush1.msra.mxu0 %v489
  %512 = vmatprep.subr.mxu0 0.0
  %513 = vmatpush1.msra.mxu0 %v490
  %514 = vmatprep.subr.mxu0 0.0
  %515 = vmatpush1.msra.mxu0 %v491
  %516 = vmatprep.subr.mxu0 0.0
  %517 = vmatpush1.msra.mxu0 %v492
  %518 = vmatprep.subr.mxu0 0.0
  %519 = vmatpush1.msra.mxu0 %v493
  %520 = vmatprep.subr.mxu0 0.0
  %521 = vmatpush1.msra.mxu0 %v494
  %522 = vmatprep.subr.mxu0 0.0
  %523 = vmatpush1.msra.mxu0 %v495
  %524 = vmatprep.subr.mxu0 0.0
  %525 = vmatpush1.msra.mxu0 %v496
  %526 = vmatprep.subr.mxu0 0.0
  %527 = vmatpush1.msra.mxu0 %v497
  %528 = vmatprep.subr.mxu0 0.0
  %529 = vmatpush1.msra.mxu0 %v498
  %530 = vmatprep.subr.mxu0 0.0
  %531 = vmatpush1.msra.mxu0 %v499
  %532 = vmatprep.subr.mxu0 0.0
  %533 = vmatpush1.msra.mxu0 0.0
  %534 = vmatprep.subr.mxu0 0.0
  %535 = vmatpush1.msra.mxu0 0.0
  %536 = vmatprep.subr.mxu0 0.0
  %537 = vmatpush1.msra.mxu0 0.0
  %538 = vmatprep.subr.mxu0 0.0
  %539 = vmatpush1.msra.mxu0 0.0
  %540 = vmatprep.subr.mxu0 0.0
  %541 = vmatpush1.msra.mxu0 0.0
  %542 = vmatprep.subr.mxu0 0.0
  %543 = vmatpush1.msra.mxu0 0.0
  %544 = vmatprep.subr.mxu0 0.0
  %545 = vmatpush1.msra.mxu0 0.0
  %546 = vmatprep.subr.mxu0 0.0
  %547 = vmatpush1.msra.mxu0 0.0
  %548 = vmatprep.subr.mxu0 0.0
  %549 = vmatpush1.msra.mxu0 0.0
  %550 = vmatprep.subr.mxu0 0.0
  %551 = vmatpush1.msra.mxu0 0.0
  %552 = vmatprep.subr.mxu0 0.0
  %553 = vmatpush1.msra.mxu0 0.0
  %554 = vmatprep.subr.mxu0 0.0
  %555 = vmatpush1.msra.mxu0 0.0
  %556 = vmatprep.subr.mxu0 0.0
  %557 = vmatpush1.msra.mxu0 0.0
  %558 = vmatprep.subr.mxu0 0.0
  %559 = vmatpush1.msra.mxu0 0.0
  %560 = vmatprep.subr.mxu0 0.0
  %561 = vmatpush1.msra.mxu0 0.0
  %562 = vmatprep.subr.mxu0 0.0
  %563 = vmatpush1.msra.mxu0 0.0
  %564 = vmatprep.mubr.f32.mxu0 0.0
  %565 = vmatmul.mubr.f32.gmra.mrb[0].mxu0 %v483
  %v566 = vpop.f32.mrb[0].mxu0
  %v567 = vadd.f32 0.0, %v566
  %v568 = vpop.f32.mrb[0].mxu0
  %569 = vdwg.mxu0
  %v570 = vsub.f32 0.0, %v567
  %v571 = vmax.f32 %v570, 0.0
  %573 = vrot.lane.b32.xlu0 %v571, 120
  %v574 = vpop.permute.xlu0 %573
  %v576 = vadd.f32 %v567, %v574
  %v577 = vadd.f32 %v576, %v132
  %v578 = vmul.f32 %v577, 0.1
  %v579 = vmul.f32 %v567, 0.1
  %v580 = vmax.f32 %v567, 0.0
  %v581 = vadd.f32 %v580, %v140
  %v582 = vmul.f32 %v581, 0.1
  %584 = vrot.lane.b32.xlu0 %v582, 8
  %v585 = vpop.permute.xlu0 %584
  %v587 = vadd.f32 %v579, %v585
  %v588 = vsub.f32 1.0, %v473
  %590 = vrot.lane.b32.xlu0 %v588, 32
  %v591 = vpop.permute.xlu0 %590
  %v593 = vmul.f32 %v578, %v591
  %v594 = vadd.f32 %v473, 0.05
  %v595 = vadd.f32 %v587, 1.0
  %597 = vrot.lane.b32.xlu0 %v595, 80
  %v598 = vpop.permute.xlu0 %597
  %v600 = vmul.f32 %v594, %v598
  %602 = vrot.lane.b32.xlu0 %v600, 32
  %v603 = vpop.permute.xlu0 %602
  %v605 = vsub.f32 %v593, %v603
  %607 = vrot.lane.b32.xlu0 %v476, 64
  %v608 = vpop.permute.xlu0 %607
  %v610 = vadd.f32 %v605, %v608
  %v611 = vmul.f32 %v610, 0.01
  %613 = vrot.lane.b32.xlu0 %v611, 96
  %v614 = vpop.permute.xlu0 %613
  %v616 = vadd.f32 %v473, %v614
  %v617 = vmax.f32 %v616, 0.0
  %v618 = vmin.f32 %v617, 1.0
  %v619 = vsel %vm180, %v618, 0.0
  %620 = vst [vmem:[%s3 + $0x3] sm:$0x1] %v567
  %621 = vst [vmem:[%s4 + $0x3] sm:$0x1] %v619
  %v622 = vld [vmem:[%s0 + $0x4] sm:$0x1]
  %623 = vrot.lane.b32.xlu0 %v480, 10
  %v624 = vpop.permute.xlu0 %623
  %v625 = vsel %vm23, %v624, 0.0
  %v626 = vsel %vm21, %v622, %v625
  %v627 = vmul.f32 %v482, 0.95
  %v628 = vadd.f32 %v626, %v627
  %v629 = vadd.f32 %v626, %v619
  %v630 = vld [vmem:[%s1] sm:$0xff]
  %v631 = vld [vmem:[%s1 + $0x8] sm:$0xff]
  %v632 = vld [vmem:[%s1 + $0x10] sm:$0xff]
  %v633 = vld [vmem:[%s1 + $0x18] sm:$0xff]
  %v634 = vld [vmem:[%s1 + $0x20] sm:$0xff]
  %v635 = vld [vmem:[%s1 + $0x28] sm:$0xff]
  %v636 = vld [vmem:[%s1 + $0x30] sm:$0xff]
  %v637 = vld [vmem:[%s1 + $0x38] sm:$0xff]
  %v638 = vld [vmem:[%s1 + $0x40] sm:$0xff]
  %v639 = vld [vmem:[%s1 + $0x48] sm:$0xff]
  %v640 = vld [vmem:[%s1 + $0x50] sm:$0xff]
  %v641 = vld [vmem:[%s1 + $0x58] sm:$0xff]
  %v642 = vld [vmem:[%s1 + $0x60] sm:$0xff]
  %v643 = vld [vmem:[%s1 + $0x68] sm:$0xff]
  %v644 = vld [vmem:[%s1 + $0x70] sm:$0xff]
  %v645 = vld [vmem:[%s1 + $0x78] sm:$0xff]
  %646 = vmatprep.subr.mxu0 0.0
  %647 = vmatpush1.msra.mxu0 %v630
  %648 = vmatprep.subr.mxu0 0.0
  %649 = vmatpush1.msra.mxu0 %v631
  %650 = vmatprep.subr.mxu0 0.0
  %651 = vmatpush1.msra.mxu0 %v632
  %652 = vmatprep.subr.mxu0 0.0
  %653 = vmatpush1.msra.mxu0 %v633
  %654 = vmatprep.subr.mxu0 0.0
  %655 = vmatpush1.msra.mxu0 %v634
  %656 = vmatprep.subr.mxu0 0.0
  %657 = vmatpush1.msra.mxu0 %v635
  %658 = vmatprep.subr.mxu0 0.0
  %659 = vmatpush1.msra.mxu0 %v636
  %660 = vmatprep.subr.mxu0 0.0
  %661 = vmatpush1.msra.mxu0 %v637
  %662 = vmatprep.subr.mxu0 0.0
  %663 = vmatpush1.msra.mxu0 %v638
  %664 = vmatprep.subr.mxu0 0.0
  %665 = vmatpush1.msra.mxu0 %v639
  %666 = vmatprep.subr.mxu0 0.0
  %667 = vmatpush1.msra.mxu0 %v640
  %668 = vmatprep.subr.mxu0 0.0
  %669 = vmatpush1.msra.mxu0 %v641
  %670 = vmatprep.subr.mxu0 0.0
  %671 = vmatpush1.msra.mxu0 %v642
  %672 = vmatprep.subr.mxu0 0.0
  %673 = vmatpush1.msra.mxu0 %v643
  %674 = vmatprep.subr.mxu0 0.0
  %675 = vmatpush1.msra.mxu0 %v644
  %676 = vmatprep.subr.mxu0 0.0
  %677 = vmatpush1.msra.mxu0 %v645
  %678 = vmatprep.subr.mxu0 0.0
  %679 = vmatpush1.msra.mxu0 0.0
  %680 = vmatprep.subr.mxu0 0.0
  %681 = vmatpush1.msra.mxu0 0.0
  %682 = vmatprep.subr.mxu0 0.0
  %683 = vmatpush1.msra.mxu0 0.0
  %684 = vmatprep.subr.mxu0 0.0
  %685 = vmatpush1.msra.mxu0 0.0
  %686 = vmatprep.subr.mxu0 0.0
  %687 = vmatpush1.msra.mxu0 0.0
  %688 = vmatprep.subr.mxu0 0.0
  %689 = vmatpush1.msra.mxu0 0.0
  %690 = vmatprep.subr.mxu0 0.0
  %691 = vmatpush1.msra.mxu0 0.0
  %692 = vmatprep.subr.mxu0 0.0
  %693 = vmatpush1.msra.mxu0 0.0
  %694 = vmatprep.subr.mxu0 0.0
  %695 = vmatpush1.msra.mxu0 0.0
  %696 = vmatprep.subr.mxu0 0.0
  %697 = vmatpush1.msra.mxu0 0.0
  %698 = vmatprep.subr.mxu0 0.0
  %699 = vmatpush1.msra.mxu0 0.0
  %700 = vmatprep.subr.mxu0 0.0
  %701 = vmatpush1.msra.mxu0 0.0
  %702 = vmatprep.subr.mxu0 0.0
  %703 = vmatpush1.msra.mxu0 0.0
  %704 = vmatprep.subr.mxu0 0.0
  %705 = vmatpush1.msra.mxu0 0.0
  %706 = vmatprep.subr.mxu0 0.0
  %707 = vmatpush1.msra.mxu0 0.0
  %708 = vmatprep.subr.mxu0 0.0
  %709 = vmatpush1.msra.mxu0 0.0
  %710 = vmatprep.mubr.f32.mxu0 0.0
  %711 = vmatmul.mubr.f32.gmra.mrb[0].mxu0 %v629
  %v712 = vpop.f32.mrb[0].mxu0
  %v713 = vadd.f32 0.0, %v712
  %v714 = vpop.f32.mrb[0].mxu0
  %715 = vdwg.mxu0
  %v716 = vsub.f32 0.0, %v713
  %v717 = vmax.f32 %v716, 0.0
  %719 = vrot.lane.b32.xlu0 %v717, 120
  %v720 = vpop.permute.xlu0 %719
  %v722 = vadd.f32 %v713, %v720
  %v723 = vadd.f32 %v722, %v132
  %v724 = vmul.f32 %v723, 0.1
  %v725 = vmul.f32 %v713, 0.1
  %v726 = vmax.f32 %v713, 0.0
  %v727 = vadd.f32 %v726, %v140
  %v728 = vmul.f32 %v727, 0.1
  %730 = vrot.lane.b32.xlu0 %v728, 8
  %v731 = vpop.permute.xlu0 %730
  %v733 = vadd.f32 %v725, %v731
  %v734 = vsub.f32 1.0, %v619
  %736 = vrot.lane.b32.xlu0 %v734, 32
  %v737 = vpop.permute.xlu0 %736
  %v739 = vmul.f32 %v724, %v737
  %v740 = vadd.f32 %v619, 0.05
  %v741 = vadd.f32 %v733, 1.0
  %743 = vrot.lane.b32.xlu0 %v741, 80
  %v744 = vpop.permute.xlu0 %743
  %v746 = vmul.f32 %v740, %v744
  %748 = vrot.lane.b32.xlu0 %v746, 32
  %v749 = vpop.permute.xlu0 %748
  %v751 = vsub.f32 %v739, %v749
  %753 = vrot.lane.b32.xlu0 %v622, 64
  %v754 = vpop.permute.xlu0 %753
  %v756 = vadd.f32 %v751, %v754
  %v757 = vmul.f32 %v756, 0.01
  %759 = vrot.lane.b32.xlu0 %v757, 96
  %v760 = vpop.permute.xlu0 %759
  %v762 = vadd.f32 %v619, %v760
  %v763 = vmax.f32 %v762, 0.0
  %v764 = vmin.f32 %v763, 1.0
  %v765 = vsel %vm180, %v764, 0.0
  %766 = vst [vmem:[%s3 + $0x4] sm:$0x1] %v713
  %767 = vst [vmem:[%s4 + $0x4] sm:$0x1] %v765
  %v768 = vld [vmem:[%s0 + $0x5] sm:$0x1]
  %769 = vrot.lane.b32.xlu0 %v626, 10
  %v770 = vpop.permute.xlu0 %769
  %v771 = vsel %vm23, %v770, 0.0
  %v772 = vsel %vm21, %v768, %v771
  %v773 = vmul.f32 %v628, 0.95
  %v774 = vadd.f32 %v772, %v773
  %v775 = vadd.f32 %v772, %v765
  %v776 = vld [vmem:[%s1] sm:$0xff]
  %v777 = vld [vmem:[%s1 + $0x8] sm:$0xff]
  %v778 = vld [vmem:[%s1 + $0x10] sm:$0xff]
  %v779 = vld [vmem:[%s1 + $0x18] sm:$0xff]
  %v780 = vld [vmem:[%s1 + $0x20] sm:$0xff]
  %v781 = vld [vmem:[%s1 + $0x28] sm:$0xff]
  %v782 = vld [vmem:[%s1 + $0x30] sm:$0xff]
  %v783 = vld [vmem:[%s1 + $0x38] sm:$0xff]
  %v784 = vld [vmem:[%s1 + $0x40] sm:$0xff]
  %v785 = vld [vmem:[%s1 + $0x48] sm:$0xff]
  %v786 = vld [vmem:[%s1 + $0x50] sm:$0xff]
  %v787 = vld [vmem:[%s1 + $0x58] sm:$0xff]
  %v788 = vld [vmem:[%s1 + $0x60] sm:$0xff]
  %v789 = vld [vmem:[%s1 + $0x68] sm:$0xff]
  %v790 = vld [vmem:[%s1 + $0x70] sm:$0xff]
  %v791 = vld [vmem:[%s1 + $0x78] sm:$0xff]
  %792 = vmatprep.subr.mxu0 0.0
  %793 = vmatpush1.msra.mxu0 %v776
  %794 = vmatprep.subr.mxu0 0.0
  %795 = vmatpush1.msra.mxu0 %v777
  %796 = vmatprep.subr.mxu0 0.0
  %797 = vmatpush1.msra.mxu0 %v778
  %798 = vmatprep.subr.mxu0 0.0
  %799 = vmatpush1.msra.mxu0 %v779
  %800 = vmatprep.subr.mxu0 0.0
  %801 = vmatpush1.msra.mxu0 %v780
  %802 = vmatprep.subr.mxu0 0.0
  %803 = vmatpush1.msra.mxu0 %v781
  %804 = vmatprep.subr.mxu0 0.0
  %805 = vmatpush1.msra.mxu0 %v782
  %806 = vmatprep.subr.mxu0 0.0
  %807 = vmatpush1.msra.mxu0 %v783
  %808 = vmatprep.subr.mxu0 0.0
  %809 = vmatpush1.msra.mxu0 %v784
  %810 = vmatprep.subr.mxu0 0.0
  %811 = vmatpush1.msra.mxu0 %v785
  %812 = vmatprep.subr.mxu0 0.0
  %813 = vmatpush1.msra.mxu0 %v786
  %814 = vmatprep.subr.mxu0 0.0
  %815 = vmatpush1.msra.mxu0 %v787
  %816 = vmatprep.subr.mxu0 0.0
  %817 = vmatpush1.msra.mxu0 %v788
  %818 = vmatprep.subr.mxu0 0.0
  %819 = vmatpush1.msra.mxu0 %v789
  %820 = vmatprep.subr.mxu0 0.0
  %821 = vmatpush1.msra.mxu0 %v790
  %822 = vmatprep.subr.mxu0 0.0
  %823 = vmatpush1.msra.mxu0 %v791
  %824 = vmatprep.subr.mxu0 0.0
  %825 = vmatpush1.msra.mxu0 0.0
  %826 = vmatprep.subr.mxu0 0.0
  %827 = vmatpush1.msra.mxu0 0.0
  %828 = vmatprep.subr.mxu0 0.0
  %829 = vmatpush1.msra.mxu0 0.0
  %830 = vmatprep.subr.mxu0 0.0
  %831 = vmatpush1.msra.mxu0 0.0
  %832 = vmatprep.subr.mxu0 0.0
  %833 = vmatpush1.msra.mxu0 0.0
  %834 = vmatprep.subr.mxu0 0.0
  %835 = vmatpush1.msra.mxu0 0.0
  %836 = vmatprep.subr.mxu0 0.0
  %837 = vmatpush1.msra.mxu0 0.0
  %838 = vmatprep.subr.mxu0 0.0
  %839 = vmatpush1.msra.mxu0 0.0
  %840 = vmatprep.subr.mxu0 0.0
  %841 = vmatpush1.msra.mxu0 0.0
  %842 = vmatprep.subr.mxu0 0.0
  %843 = vmatpush1.msra.mxu0 0.0
  %844 = vmatprep.subr.mxu0 0.0
  %845 = vmatpush1.msra.mxu0 0.0
  %846 = vmatprep.subr.mxu0 0.0
  %847 = vmatpush1.msra.mxu0 0.0
  %848 = vmatprep.subr.mxu0 0.0
  %849 = vmatpush1.msra.mxu0 0.0
  %850 = vmatprep.subr.mxu0 0.0
  %851 = vmatpush1.msra.mxu0 0.0
  %852 = vmatprep.subr.mxu0 0.0
  %853 = vmatpush1.msra.mxu0 0.0
  %854 = vmatprep.subr.mxu0 0.0
  %855 = vmatpush1.msra.mxu0 0.0
  %856 = vmatprep.mubr.f32.mxu0 0.0
  %857 = vmatmul.mubr.f32.gmra.mrb[0].mxu0 %v775
  %v858 = vpop.f32.mrb[0].mxu0
  %v859 = vadd.f32 0.0, %v858
  %v860 = vpop.f32.mrb[0].mxu0
  %861 = vdwg.mxu0
  %v862 = vsub.f32 0.0, %v859
  %v863 = vmax.f32 %v862, 0.0
  %865 = vrot.lane.b32.xlu0 %v863, 120
  %v866 = vpop.permute.xlu0 %865
  %v868 = vadd.f32 %v859, %v866
  %v869 = vadd.f32 %v868, %v132
  %v870 = vmul.f32 %v869, 0.1
  %v871 = vmul.f32 %v859, 0.1
  %v872 = vmax.f32 %v859, 0.0
  %v873 = vadd.f32 %v872, %v140
  %v874 = vmul.f32 %v873, 0.1
  %876 = vrot.lane.b32.xlu0 %v874, 8
  %v877 = vpop.permute.xlu0 %876
  %v879 = vadd.f32 %v871, %v877
  %v880 = vsub.f32 1.0, %v765
  %882 = vrot.lane.b32.xlu0 %v880, 32
  %v883 = vpop.permute.xlu0 %882
  %v885 = vmul.f32 %v870, %v883
  %v886 = vadd.f32 %v765, 0.05
  %v887 = vadd.f32 %v879, 1.0
  %889 = vrot.lane.b32.xlu0 %v887, 80
  %v890 = vpop.permute.xlu0 %889
  %v892 = vmul.f32 %v886, %v890
  %894 = vrot.lane.b32.xlu0 %v892, 32
  %v895 = vpop.permute.xlu0 %894
  %v897 = vsub.f32 %v885, %v895
  %899 = vrot.lane.b32.xlu0 %v768, 64
  %v900 = vpop.permute.xlu0 %899
  %v902 = vadd.f32 %v897, %v900
  %v903 = vmul.f32 %v902, 0.01
  %905 = vrot.lane.b32.xlu0 %v903, 96
  %v906 = vpop.permute.xlu0 %905
  %v908 = vadd.f32 %v765, %v906
  %v909 = vmax.f32 %v908, 0.0
  %v910 = vmin.f32 %v909, 1.0
  %v911 = vsel %vm180, %v910, 0.0
  %912 = vst [vmem:[%s3 + $0x5] sm:$0x1] %v859
  %913 = vst [vmem:[%s4 + $0x5] sm:$0x1] %v911
  %v914 = vld [vmem:[%s0 + $0x6] sm:$0x1]
  %915 = vrot.lane.b32.xlu0 %v772, 10
  %v916 = vpop.permute.xlu0 %915
  %v917 = vsel %vm23, %v916, 0.0
  %v918 = vsel %vm21, %v914, %v917
  %v919 = vmul.f32 %v774, 0.95
  %v920 = vadd.f32 %v918, %v919
  %v921 = vadd.f32 %v918, %v911
  %v922 = vld [vmem:[%s1] sm:$0xff]
  %v923 = vld [vmem:[%s1 + $0x8] sm:$0xff]
  %v924 = vld [vmem:[%s1 + $0x10] sm:$0xff]
  %v925 = vld [vmem:[%s1 + $0x18] sm:$0xff]
  %v926 = vld [vmem:[%s1 + $0x20] sm:$0xff]
  %v927 = vld [vmem:[%s1 + $0x28] sm:$0xff]
  %v928 = vld [vmem:[%s1 + $0x30] sm:$0xff]
  %v929 = vld [vmem:[%s1 + $0x38] sm:$0xff]
  %v930 = vld [vmem:[%s1 + $0x40] sm:$0xff]
  %v931 = vld [vmem:[%s1 + $0x48] sm:$0xff]
  %v932 = vld [vmem:[%s1 + $0x50] sm:$0xff]
  %v933 = vld [vmem:[%s1 + $0x58] sm:$0xff]
  %v934 = vld [vmem:[%s1 + $0x60] sm:$0xff]
  %v935 = vld [vmem:[%s1 + $0x68] sm:$0xff]
  %v936 = vld [vmem:[%s1 + $0x70] sm:$0xff]
  %v937 = vld [vmem:[%s1 + $0x78] sm:$0xff]
  %938 = vmatprep.subr.mxu0 0.0
  %939 = vmatpush1.msra.mxu0 %v922
  %940 = vmatprep.subr.mxu0 0.0
  %941 = vmatpush1.msra.mxu0 %v923
  %942 = vmatprep.subr.mxu0 0.0
  %943 = vmatpush1.msra.mxu0 %v924
  %944 = vmatprep.subr.mxu0 0.0
  %945 = vmatpush1.msra.mxu0 %v925
  %946 = vmatprep.subr.mxu0 0.0
  %947 = vmatpush1.msra.mxu0 %v926
  %948 = vmatprep.subr.mxu0 0.0
  %949 = vmatpush1.msra.mxu0 %v927
  %950 = vmatprep.subr.mxu0 0.0
  %951 = vmatpush1.msra.mxu0 %v928
  %952 = vmatprep.subr.mxu0 0.0
  %953 = vmatpush1.msra.mxu0 %v929
  %954 = vmatprep.subr.mxu0 0.0
  %955 = vmatpush1.msra.mxu0 %v930
  %956 = vmatprep.subr.mxu0 0.0
  %957 = vmatpush1.msra.mxu0 %v931
  %958 = vmatprep.subr.mxu0 0.0
  %959 = vmatpush1.msra.mxu0 %v932
  %960 = vmatprep.subr.mxu0 0.0
  %961 = vmatpush1.msra.mxu0 %v933
  %962 = vmatprep.subr.mxu0 0.0
  %963 = vmatpush1.msra.mxu0 %v934
  %964 = vmatprep.subr.mxu0 0.0
  %965 = vmatpush1.msra.mxu0 %v935
  %966 = vmatprep.subr.mxu0 0.0
  %967 = vmatpush1.msra.mxu0 %v936
  %968 = vmatprep.subr.mxu0 0.0
  %969 = vmatpush1.msra.mxu0 %v937
  %970 = vmatprep.subr.mxu0 0.0
  %971 = vmatpush1.msra.mxu0 0.0
  %972 = vmatprep.subr.mxu0 0.0
  %973 = vmatpush1.msra.mxu0 0.0
  %974 = vmatprep.subr.mxu0 0.0
  %975 = vmatpush1.msra.mxu0 0.0
  %976 = vmatprep.subr.mxu0 0.0
  %977 = vmatpush1.msra.mxu0 0.0
  %978 = vmatprep.subr.mxu0 0.0
  %979 = vmatpush1.msra.mxu0 0.0
  %980 = vmatprep.subr.mxu0 0.0
  %981 = vmatpush1.msra.mxu0 0.0
  %982 = vmatprep.subr.mxu0 0.0
  %983 = vmatpush1.msra.mxu0 0.0
  %984 = vmatprep.subr.mxu0 0.0
  %985 = vmatpush1.msra.mxu0 0.0
  %986 = vmatprep.subr.mxu0 0.0
  %987 = vmatpush1.msra.mxu0 0.0
  %988 = vmatprep.subr.mxu0 0.0
  %989 = vmatpush1.msra.mxu0 0.0
  %990 = vmatprep.subr.mxu0 0.0
  %991 = vmatpush1.msra.mxu0 0.0
  %992 = vmatprep.subr.mxu0 0.0
  %993 = vmatpush1.msra.mxu0 0.0
  %994 = vmatprep.subr.mxu0 0.0
  %995 = vmatpush1.msra.mxu0 0.0
  %996 = vmatprep.subr.mxu0 0.0
  %997 = vmatpush1.msra.mxu0 0.0
  %998 = vmatprep.subr.mxu0 0.0
  %999 = vmatpush1.msra.mxu0 0.0
  %1000 = vmatprep.subr.mxu0 0.0
  %1001 = vmatpush1.msra.mxu0 0.0
  %1002 = vmatprep.mubr.f32.mxu0 0.0
  %1003 = vmatmul.mubr.f32.gmra.mrb[0].mxu0 %v921
  %v1004 = vpop.f32.mrb[0].mxu0
  %v1005 = vadd.f32 0.0, %v1004
  %v1006 = vpop.f32.mrb[0].mxu0
  %1007 = vdwg.mxu0
  %v1008 = vsub.f32 0.0, %v1005
  %v1009 = vmax.f32 %v1008, 0.0
  %1011 = vrot.lane.b32.xlu0 %v1009, 120
  %v1012 = vpop.permute.xlu0 %1011
  %v1014 = vadd.f32 %v1005, %v1012
  %v1015 = vadd.f32 %v1014, %v132
  %v1016 = vmul.f32 %v1015, 0.1
  %v1017 = vmul.f32 %v1005, 0.1
  %v1018 = vmax.f32 %v1005, 0.0
  %v1019 = vadd.f32 %v1018, %v140
  %v1020 = vmul.f32 %v1019, 0.1
  %1022 = vrot.lane.b32.xlu0 %v1020, 8
  %v1023 = vpop.permute.xlu0 %1022
  %v1025 = vadd.f32 %v1017, %v1023
  %v1026 = vsub.f32 1.0, %v911
  %1028 = vrot.lane.b32.xlu0 %v1026, 32
  %v1029 = vpop.permute.xlu0 %1028
  %v1031 = vmul.f32 %v1016, %v1029
  %v1032 = vadd.f32 %v911, 0.05
  %v1033 = vadd.f32 %v1025, 1.0
  %1035 = vrot.lane.b32.xlu0 %v1033, 80
  %v1036 = vpop.permute.xlu0 %1035
  %v1038 = vmul.f32 %v1032, %v1036
  %1040 = vrot.lane.b32.xlu0 %v1038, 32
  %v1041 = vpop.permute.xlu0 %1040
  %v1043 = vsub.f32 %v1031, %v1041
  %1045 = vrot.lane.b32.xlu0 %v914, 64
  %v1046 = vpop.permute.xlu0 %1045
  %v1048 = vadd.f32 %v1043, %v1046
  %v1049 = vmul.f32 %v1048, 0.01
  %1051 = vrot.lane.b32.xlu0 %v1049, 96
  %v1052 = vpop.permute.xlu0 %1051
  %v1054 = vadd.f32 %v911, %v1052
  %v1055 = vmax.f32 %v1054, 0.0
  %v1056 = vmin.f32 %v1055, 1.0
  %v1057 = vsel %vm180, %v1056, 0.0
  %1058 = vst [vmem:[%s3 + $0x6] sm:$0x1] %v1005
  %1059 = vst [vmem:[%s4 + $0x6] sm:$0x1] %v1057
  %v1060 = vld [vmem:[%s0 + $0x7] sm:$0x1]
  %1061 = vrot.lane.b32.xlu0 %v918, 10
  %v1062 = vpop.permute.xlu0 %1061
  %v1063 = vsel %vm23, %v1062, 0.0
  %v1064 = vsel %vm21, %v1060, %v1063
  %v1065 = vmul.f32 %v920, 0.95
  %v1066 = vadd.f32 %v1064, %v1065
  %v1067 = vadd.f32 %v1064, %v1057
  %v1068 = vld [vmem:[%s1] sm:$0xff]
  %v1069 = vld [vmem:[%s1 + $0x8] sm:$0xff]
  %v1070 = vld [vmem:[%s1 + $0x10] sm:$0xff]
  %v1071 = vld [vmem:[%s1 + $0x18] sm:$0xff]
  %v1072 = vld [vmem:[%s1 + $0x20] sm:$0xff]
  %v1073 = vld [vmem:[%s1 + $0x28] sm:$0xff]
  %v1074 = vld [vmem:[%s1 + $0x30] sm:$0xff]
  %v1075 = vld [vmem:[%s1 + $0x38] sm:$0xff]
  %v1076 = vld [vmem:[%s1 + $0x40] sm:$0xff]
  %v1077 = vld [vmem:[%s1 + $0x48] sm:$0xff]
  %v1078 = vld [vmem:[%s1 + $0x50] sm:$0xff]
  %v1079 = vld [vmem:[%s1 + $0x58] sm:$0xff]
  %v1080 = vld [vmem:[%s1 + $0x60] sm:$0xff]
  %v1081 = vld [vmem:[%s1 + $0x68] sm:$0xff]
  %v1082 = vld [vmem:[%s1 + $0x70] sm:$0xff]
  %v1083 = vld [vmem:[%s1 + $0x78] sm:$0xff]
  %1084 = vmatprep.subr.mxu0 0.0
  %1085 = vmatpush1.msra.mxu0 %v1068
  %1086 = vmatprep.subr.mxu0 0.0
  %1087 = vmatpush1.msra.mxu0 %v1069
  %1088 = vmatprep.subr.mxu0 0.0
  %1089 = vmatpush1.msra.mxu0 %v1070
  %1090 = vmatprep.subr.mxu0 0.0
  %1091 = vmatpush1.msra.mxu0 %v1071
  %1092 = vmatprep.subr.mxu0 0.0
  %1093 = vmatpush1.msra.mxu0 %v1072
  %1094 = vmatprep.subr.mxu0 0.0
  %1095 = vmatpush1.msra.mxu0 %v1073
  %1096 = vmatprep.subr.mxu0 0.0
  %1097 = vmatpush1.msra.mxu0 %v1074
  %1098 = vmatprep.subr.mxu0 0.0
  %1099 = vmatpush1.msra.mxu0 %v1075
  %1100 = vmatprep.subr.mxu0 0.0
  %1101 = vmatpush1.msra.mxu0 %v1076
  %1102 = vmatprep.subr.mxu0 0.0
  %1103 = vmatpush1.msra.mxu0 %v1077
  %1104 = vmatprep.subr.mxu0 0.0
  %1105 = vmatpush1.msra.mxu0 %v1078
  %1106 = vmatprep.subr.mxu0 0.0
  %1107 = vmatpush1.msra.mxu0 %v1079
  %1108 = vmatprep.subr.mxu0 0.0
  %1109 = vmatpush1.msra.mxu0 %v1080
  %1110 = vmatprep.subr.mxu0 0.0
  %1111 = vmatpush1.msra.mxu0 %v1081
  %1112 = vmatprep.subr.mxu0 0.0
  %1113 = vmatpush1.msra.mxu0 %v1082
  %1114 = vmatprep.subr.mxu0 0.0
  %1115 = vmatpush1.msra.mxu0 %v1083
  %1116 = vmatprep.subr.mxu0 0.0
  %1117 = vmatpush1.msra.mxu0 0.0
  %1118 = vmatprep.subr.mxu0 0.0
  %1119 = vmatpush1.msra.mxu0 0.0
  %1120 = vmatprep.subr.mxu0 0.0
  %1121 = vmatpush1.msra.mxu0 0.0
  %1122 = vmatprep.subr.mxu0 0.0
  %1123 = vmatpush1.msra.mxu0 0.0
  %1124 = vmatprep.subr.mxu0 0.0
  %1125 = vmatpush1.msra.mxu0 0.0
  %1126 = vmatprep.subr.mxu0 0.0
  %1127 = vmatpush1.msra.mxu0 0.0
  %1128 = vmatprep.subr.mxu0 0.0
  %1129 = vmatpush1.msra.mxu0 0.0
  %1130 = vmatprep.subr.mxu0 0.0
  %1131 = vmatpush1.msra.mxu0 0.0
  %1132 = vmatprep.subr.mxu0 0.0
  %1133 = vmatpush1.msra.mxu0 0.0
  %1134 = vmatprep.subr.mxu0 0.0
  %1135 = vmatpush1.msra.mxu0 0.0
  %1136 = vmatprep.subr.mxu0 0.0
  %1137 = vmatpush1.msra.mxu0 0.0
  %1138 = vmatprep.subr.mxu0 0.0
  %1139 = vmatpush1.msra.mxu0 0.0
  %1140 = vmatprep.subr.mxu0 0.0
  %1141 = vmatpush1.msra.mxu0 0.0
  %1142 = vmatprep.subr.mxu0 0.0
  %1143 = vmatpush1.msra.mxu0 0.0
  %1144 = vmatprep.subr.mxu0 0.0
  %1145 = vmatpush1.msra.mxu0 0.0
  %1146 = vmatprep.subr.mxu0 0.0
  %1147 = vmatpush1.msra.mxu0 0.0
  %1148 = vmatprep.mubr.f32.mxu0 0.0
  %1149 = vmatmul.mubr.f32.gmra.mrb[0].mxu0 %v1067
  %v1150 = vpop.f32.mrb[0].mxu0
  %v1151 = vadd.f32 0.0, %v1150
  %v1152 = vpop.f32.mrb[0].mxu0
  %1153 = vdwg.mxu0
  %v1154 = vsub.f32 0.0, %v1151
  %v1155 = vmax.f32 %v1154, 0.0
  %1157 = vrot.lane.b32.xlu0 %v1155, 120
  %v1158 = vpop.permute.xlu0 %1157
  %v1160 = vadd.f32 %v1151, %v1158
  %v1161 = vadd.f32 %v1160, %v132
  %v1162 = vmul.f32 %v1161, 0.1
  %v1163 = vmul.f32 %v1151, 0.1
  %v1164 = vmax.f32 %v1151, 0.0
  %v1165 = vadd.f32 %v1164, %v140
  %v1166 = vmul.f32 %v1165, 0.1
  %1168 = vrot.lane.b32.xlu0 %v1166, 8
  %v1169 = vpop.permute.xlu0 %1168
  %v1171 = vadd.f32 %v1163, %v1169
  %v1172 = vsub.f32 1.0, %v1057
  %1174 = vrot.lane.b32.xlu0 %v1172, 32
  %v1175 = vpop.permute.xlu0 %1174
  %v1177 = vmul.f32 %v1162, %v1175
  %v1178 = vadd.f32 %v1057, 0.05
  %v1179 = vadd.f32 %v1171, 1.0
  %1181 = vrot.lane.b32.xlu0 %v1179, 80
  %v1182 = vpop.permute.xlu0 %1181
  %v1184 = vmul.f32 %v1178, %v1182
  %1186 = vrot.lane.b32.xlu0 %v1184, 32
  %v1187 = vpop.permute.xlu0 %1186
  %v1189 = vsub.f32 %v1177, %v1187
  %1191 = vrot.lane.b32.xlu0 %v1060, 64
  %v1192 = vpop.permute.xlu0 %1191
  %v1194 = vadd.f32 %v1189, %v1192
  %v1195 = vmul.f32 %v1194, 0.01
  %1197 = vrot.lane.b32.xlu0 %v1195, 96
  %v1198 = vpop.permute.xlu0 %1197
  %v1200 = vadd.f32 %v1057, %v1198
  %v1201 = vmax.f32 %v1200, 0.0
  %v1202 = vmin.f32 %v1201, 1.0
  %v1203 = vsel %vm180, %v1202, 0.0
  %1204 = vst [vmem:[%s3 + $0x7] sm:$0x1] %v1151
  %1205 = vst [vmem:[%s4 + $0x7] sm:$0x1] %v1203
  %1206 = vst [vmem:[%s5] sm:$0x1] %v1064
  %1207 = vst [vmem:[%s5 + $0x1] sm:$0x1] %v1066
  %1208 = vst [vmem:[%s5 + $0x2] sm:$0x1] %v1203
  // Predicated region
  $region14: #{pro_control_forward_seq.1} parent=0 // pred_check
    _
  $region15: #{pro_control_forward_seq.1} parent=0 // pred_check_branch
    %1210 = sbr.rel (0) target = $region17
  $region16: #{pro_control_forward_seq.1} parent=0 // pred_region
    _
  $region17: #{pro_control_forward_seq.1} parent=0 // pred_fallthru
    _
  // Predicated region
  $region18: #{pro_control_forward_seq.1} parent=0 // pred_check
    _
  $region19: #{pro_control_forward_seq.1} parent=0 // pred_check_branch
    %1212 = sbr.rel (0) target = $region21
  $region20: #{pro_control_forward_seq.1} parent=0 // pred_region
    _
  $region21: #{pro_control_forward_seq.1} parent=0 // pred_fallthru
    _
  // Predicated region
  $region22: #{pro_control_forward_seq.1} parent=0 // pred_check
    _
  $region23: #{pro_control_forward_seq.1} parent=0 // pred_check_branch
    %1214 = sbr.rel (0) target = $region25
  $region24: #{pro_control_forward_seq.1} parent=0 // pred_region
    _
  $region25: #{pro_control_forward_seq.1} parent=0 // pred_fallthru
    _
  // Predicated region
  $region26: #{pro_control_forward_seq.1} parent=0 // pred_check
    _
  $region27: #{pro_control_forward_seq.1} parent=0 // pred_check_branch
    %1216 = sbr.rel (0) target = $region29
  $region28: #{pro_control_forward_seq.1} parent=0 // pred_region
    _
  $region29: #{pro_control_forward_seq.1} parent=0 // pred_fallthru
    _
  // Predicated region
  $region30: #{pro_control_forward_seq.1} parent=0 // pred_check
    _
  $region31: #{pro_control_forward_seq.1} parent=0 // pred_check_branch
    %1218 = sbr.rel (0) target = $region33
  $region32: #{pro_control_forward_seq.1} parent=0 // pred_region
    _
  $region33: #{pro_control_forward_seq.1} parent=0 // pred_fallthru
    _
  // Predicated region
  $region34: #{pro_control_forward_seq.1} parent=0 // pred_check
    _
  $region35: #{pro_control_forward_seq.1} parent=0 // pred_check_branch
    %1220 = sbr.rel (0) target = $region37
  $region36: #{pro_control_forward_seq.1} parent=0 // pred_region
    _
  $region37: #{pro_control_forward_seq.1} parent=0 // pred_fallthru
    _

</llo_original>
